<compile_context>
chip_gen: v7x
topology: tpu7x:2x2x1
jax: 0.10.0
libtpu: 0.0.40
codegen_flags: <defaults>
</compile_context>

<pallas_src>
import functools
import math
from typing import NamedTuple

import jax
import jax.numpy as jnp
from jax.experimental import pallas as pl
from jax.experimental.pallas import tpu as pltpu


def _round_up(x, m):
    return ((x + m - 1) // m) * m


def _clamp_vmem(est_bytes, floor=16 * (1 << 20), cap=64 * (1 << 20)):
    """Explicit scoped-VMEM budget (default limit is well below physical)."""
    return int(min(cap, max(floor, 2 * est_bytes)))


# ------------------------------ in-kernel math ------------------------------ #

def _layernorm_f32(x, g, b, eps):
    mu = jnp.mean(x, axis=-1, keepdims=True)
    xc = x - mu
    var = jnp.mean(xc * xc, axis=-1, keepdims=True)
    return xc * jax.lax.rsqrt(var + eps) * g + b


def _gelu_tanh(x):
    # TODO(synk): PyTorch nn.GELU defaults to exact erf; tanh approx used here.
    c = math.sqrt(2.0 / math.pi)
    return 0.5 * x * (1.0 + jnp.tanh(c * (x + 0.044715 * x * x * x)))


# ------------------------------ Pallas kernels ------------------------------ #

def _linear_kernel(x_ref, w_ref, b_ref, o_ref, *, activation):
    # x: (tm, K) f32   w: (K, N) bf16 (VMEM-resident)   b: (1, N) f32
    x = x_ref[...].astype(jnp.bfloat16)
    y = jnp.dot(x, w_ref[...], preferred_element_type=jnp.float32) + b_ref[...]
    if activation == "gelu":
        y = _gelu_tanh(y)
    o_ref[...] = y.astype(o_ref.dtype)


def pallas_linear(x, w_bf16, b, activation=None, tile_rows=512):
    """x: (M, K) f32, w: (K, N) bf16, b: (N,) f32 -> (M, N) f32. Row-tiled."""
    M, K = x.shape
    N = w_bf16.shape[1]
    # Row-tile choice: minimal padding waste (tm ~= ceil(M / n_tiles), rounded
    # to 8), and >= 2 tiles when M allows so both v7x TensorCores get work.
    nt = pl.cdiv(M, tile_rows)
    if M >= 16:
        nt = max(nt, 2)
    tm = _round_up(pl.cdiv(M, nt), 8)
    Mp = _round_up(M, tm)
    xp = jnp.pad(x, ((0, Mp - M), (0, 0))) if Mp != M else x
    est = 2 * K * N + 4 * N + 2 * (4 * tm * K + 4 * tm * N)
    out = pl.pallas_call(
        functools.partial(_linear_kernel, activation=activation),
        out_shape=jax.ShapeDtypeStruct((Mp, N), jnp.float32),
        grid=(Mp // tm,),
        in_specs=[pl.BlockSpec((tm, K), lambda i: (i, 0)),
                  pl.BlockSpec((K, N), lambda i: (0, 0)),
                  pl.BlockSpec((1, N), lambda i: (0, 0))],
        out_specs=pl.BlockSpec((tm, N), lambda i: (i, 0)),
        compiler_params=pltpu.CompilerParams(
            dimension_semantics=("parallel",),
            vmem_limit_bytes=_clamp_vmem(est)),
    )(xp, w_bf16, b.reshape(1, N))
    return out[:M] if Mp != M else out


def _block_kernel(x_ref, ln1g_ref, ln1b_ref, qkvw_ref, qkvb_ref,
                  projw_ref, projb_ref, ln2g_ref, ln2b_ref,
                  w1_ref, b1_ref, w2_ref, b2_ref,
                  o_ref, attn_sc, *, heads, eps):
    """One FULL transformer block fused into a single kernel.

    Block covers (Bb, N, D); the residual stream stays in VMEM for the whole
    block (no HBM roundtrip between attention and MLP).
    """
    xb = x_ref[...].astype(jnp.float32)                     # (Bb, N, D)
    Bb, N, D = xb.shape
    Dh = D // heads
    scale = 1.0 / math.sqrt(Dh)

    x2 = xb.reshape(Bb * N, D)                              # flat rows for matmuls
    h = _layernorm_f32(x2, ln1g_ref[...], ln1b_ref[...], eps)
    qkv = jnp.dot(h.astype(jnp.bfloat16), qkvw_ref[...],
                  preferred_element_type=jnp.float32) + qkvb_ref[...]  # (Bb*N, 3D)
    qkv = qkv.reshape(Bb, N, 3 * D)

    # Per-head attention. Each head output lands in a (Bb, N, D) VMEM slab so
    # the output projection runs as ONE full-depth (Bb*N, D) x (D, D) matmul
    # instead of `heads` small-K matmuls.
    # TODO(synk): for production head counts (12-16), move heads onto a sublane
    # axis and use lax.fori_loop(unroll=True) to bound vreg live ranges.
    for hh in range(heads):
        lo = hh * Dh
        q = qkv[:, :, lo:lo + Dh] * scale                   # scale folded into q
        k = qkv[:, :, D + lo:D + lo + Dh]
        v = qkv[:, :, 2 * D + lo:2 * D + lo + Dh]
        s = jnp.einsum('bqd,bkd->bqk',
                       q.astype(jnp.bfloat16), k.astype(jnp.bfloat16),
                       preferred_element_type=jnp.float32)  # (Bb, N, N)
        s = s - jnp.max(s, axis=-1, keepdims=True)
        p = jnp.exp(s)
        p = p * pl.reciprocal(jnp.sum(p, axis=-1, keepdims=True), approx=True)
        oh = jnp.einsum('bqk,bkd->bqd',
                        p.astype(jnp.bfloat16), v.astype(jnp.bfloat16),
                        preferred_element_type=jnp.float32)  # (Bb, N, Dh)
        attn_sc[:, :, lo:lo + Dh] = oh.astype(attn_sc.dtype)

    attn = attn_sc[...].reshape(Bb * N, D)                   # bf16 slab
    proj = jnp.dot(attn, projw_ref[...],
                   preferred_element_type=jnp.float32) + projb_ref[...]
    x_attn = x2 + proj                                       # residual 1 (VMEM)

    h2 = _layernorm_f32(x_attn, ln2g_ref[...], ln2b_ref[...], eps)
    h1 = jnp.dot(h2.astype(jnp.bfloat16), w1_ref[...],
                 preferred_element_type=jnp.float32) + b1_ref[...]
    h1 = _gelu_tanh(h1)                                      # f32 (safe on v5e)
    h3 = jnp.dot(h1.astype(jnp.bfloat16), w2_ref[...],
                 preferred_element_type=jnp.float32) + b2_ref[...]
    out = x_attn + h3                                        # residual 2 (VMEM)
    o_ref[...] = out.reshape(Bb, N, D).astype(o_ref.dtype)


def _choose_batch_tile(B, N, D, hidden, vmem_budget=16 * (1 << 20)):
    """Batch elements per grid step: as many as fit a VMEM activation budget,
    while keeping >= 2 balanced parallel grid steps when B >= 2 (v7x 2 TCs)."""
    per_b = 4 * N * (8 * D + N + hidden) + 2 * N * D   # rough live bytes / element
    bb_max = max(1, vmem_budget // max(per_b, 1))
    target_steps = 2 if B >= 2 else 1
    for bb in range(min(B, bb_max), 0, -1):
        if B % bb == 0 and (B // bb) >= target_steps:
            return bb
    return 1


def transformer_block(x, blk, *, heads, eps=1e-6):
    """x: (B, N, D) f32 -> (B, N, D) f32. ONE fused kernel per block."""
    B, N, D = x.shape
    H = blk["fc1_w"].shape[1]
    Bb = _choose_batch_tile(B, N, D, H)
    grid = B // Bb
    est = (2 * 2 * (D * 3 * D + D * D + 2 * D * H)      # bf16 weights, 2x buffered
           + 2 * 2 * 4 * Bb * N * D                     # x in/out f32, 2x buffered
           + 4 * Bb * N * (3 * D + N + H + 2 * D)       # in-kernel intermediates
           + 2 * Bb * N * D)                            # bf16 attention slab
    return pl.pallas_call(
        functools.partial(_block_kernel, heads=heads, eps=eps),
        out_shape=jax.ShapeDtypeStruct((B, N, D), jnp.float32),
        grid=(grid,),
        in_specs=[
            pl.BlockSpec((Bb, N, D), lambda i: (i, 0, 0)),
            pl.BlockSpec((1, D), lambda i: (0, 0)),
            pl.BlockSpec((1, D), lambda i: (0, 0)),
            pl.BlockSpec((D, 3 * D), lambda i: (0, 0)),
            pl.BlockSpec((1, 3 * D), lambda i: (0, 0)),
            pl.BlockSpec((D, D), lambda i: (0, 0)),
            pl.BlockSpec((1, D), lambda i: (0, 0)),
            pl.BlockSpec((1, D), lambda i: (0, 0)),
            pl.BlockSpec((1, D), lambda i: (0, 0)),
            pl.BlockSpec((D, H), lambda i: (0, 0)),
            pl.BlockSpec((1, H), lambda i: (0, 0)),
            pl.BlockSpec((H, D), lambda i: (0, 0)),
            pl.BlockSpec((1, D), lambda i: (0, 0)),
        ],
        out_specs=pl.BlockSpec((Bb, N, D), lambda i: (i, 0, 0)),
        scratch_shapes=[pltpu.VMEM((Bb, N, D), jnp.bfloat16)],
        compiler_params=pltpu.CompilerParams(
            dimension_semantics=("parallel",),
            vmem_limit_bytes=_clamp_vmem(est)),
    )(x,
      blk["ln1_g"].reshape(1, D), blk["ln1_b"].reshape(1, D),
      blk["qkv_w"], blk["qkv_b"].reshape(1, 3 * D),
      blk["proj_w"], blk["proj_b"].reshape(1, D),
      blk["ln2_g"].reshape(1, D), blk["ln2_b"].reshape(1, D),
      blk["fc1_w"], blk["fc1_b"].reshape(1, H),
      blk["fc2_w"], blk["fc2_b"].reshape(1, D))


def _head_kernel(x_ref, g_ref, b_ref, w_ref, hb_ref, o_ref, *, eps):
    """Fused: final LayerNorm (cls token only) -> classifier matmul (padded N)."""
    x = x_ref[...].astype(jnp.float32)                   # (B, D)
    h = _layernorm_f32(x, g_ref[...], b_ref[...], eps)
    y = jnp.dot(h.astype(jnp.bfloat16), w_ref[...],
                preferred_element_type=jnp.float32) + hb_ref[...]
    o_ref[...] = y.astype(o_ref.dtype)


def head_block(cls_tok, norm_g, norm_b, head_w_bf16, head_b, *, eps=1e-6):
    B, D = cls_tok.shape
    NP = head_w_bf16.shape[1]                            # 128-padded classes
    return pl.pallas_call(
        functools.partial(_head_kernel, eps=eps),
        out_shape=jax.ShapeDtypeStruct((B, NP), jnp.float32),
    )(cls_tok, norm_g.reshape(1, D), norm_b.reshape(1, D),
      head_w_bf16, head_b.reshape(1, NP))


# --------------------------- Parameter construction ------------------------- #

class ViTConfig(NamedTuple):
    img: int
    patch: int
    in_chans: int
    embed_dim: int
    depth: int
    heads: int
    mlp_ratio: float
    num_classes: int


def init_params(key, cfg: ViTConfig):
    n_patches = (cfg.img // cfg.patch) ** 2
    n_tokens = n_patches + 1
    hidden = int(cfg.embed_dim * cfg.mlp_ratio)
    patch_dim = cfg.in_chans * cfg.patch * cfg.patch
    nc_pad = _round_up(cfg.num_classes, 128)

    def nrm(k, shape, scale=0.02):
        return scale * jax.random.normal(k, shape, dtype=jnp.float32)

    keys = jax.random.split(key, 4 + cfg.depth)
    head_w = nrm(keys[3], (cfg.embed_dim, cfg.num_classes))
    head_w_pad = jnp.zeros((cfg.embed_dim, nc_pad), jnp.float32)
    head_w_pad = head_w_pad.at[:, :cfg.num_classes].set(head_w)

    params = {
        # matmul weights stored bf16 (MXU operands); biases / LN params f32
        "patch_w": nrm(keys[0], (patch_dim, cfg.embed_dim)).astype(jnp.bfloat16),
        "patch_b": jnp.zeros((cfg.embed_dim,), jnp.float32),
        "cls_token": nrm(keys[1], (1, 1, cfg.embed_dim)),
        "pos_embed": nrm(keys[2], (1, n_tokens, cfg.embed_dim)),
        "norm_g": jnp.ones((cfg.embed_dim,), jnp.float32),
        "norm_b": jnp.zeros((cfg.embed_dim,), jnp.float32),
        "head_w": head_w_pad.astype(jnp.bfloat16),
        "head_b": jnp.zeros((nc_pad,), jnp.float32),
        "blocks": [],
    }
    for d in range(cfg.depth):
        bk = jax.random.split(keys[4 + d], 4)
        params["blocks"].append({
            "ln1_g": jnp.ones((cfg.embed_dim,), jnp.float32),
            "ln1_b": jnp.zeros((cfg.embed_dim,), jnp.float32),
            "qkv_w": nrm(bk[0], (cfg.embed_dim, 3 * cfg.embed_dim)).astype(jnp.bfloat16),
            "qkv_b": jnp.zeros((3 * cfg.embed_dim,), jnp.float32),
            "proj_w": nrm(bk[1], (cfg.embed_dim, cfg.embed_dim)).astype(jnp.bfloat16),
            "proj_b": jnp.zeros((cfg.embed_dim,), jnp.float32),
            "ln2_g": jnp.ones((cfg.embed_dim,), jnp.float32),
            "ln2_b": jnp.zeros((cfg.embed_dim,), jnp.float32),
            "fc1_w": nrm(bk[2], (cfg.embed_dim, hidden)).astype(jnp.bfloat16),
            "fc1_b": jnp.zeros((hidden,), jnp.float32),
            "fc2_w": nrm(bk[3], (hidden, cfg.embed_dim)).astype(jnp.bfloat16),
            "fc2_b": jnp.zeros((cfg.embed_dim,), jnp.float32),
        })
    return params


# ---------------------------------- Forward --------------------------------- #

def vit_warp_forward(params, x, *, cfg: ViTConfig):
    """x: (B, C, H, W) NCHW (as in PyTorch). Returns y_hat: (B, num_classes)."""
    B, C, H, W = x.shape
    P = cfg.patch
    D = cfg.embed_dim
    nH, nW = H // P, W // P
    n_patches = nH * nW

    # Patchify (XLA glue): Conv2d(C, D, P, stride=P) == linear on (C,P,P) patches.
    # TODO(synk): replace with a Pallas patch-embed kernel whose index_map walks
    # (b, nH, nW) patch tiles to avoid this extra HBM transpose pass.
    patches = (x.reshape(B, C, nH, P, nW, P)
                 .transpose(0, 2, 4, 1, 3, 5)
                 .reshape(B * n_patches, C * P * P))
    tok = pallas_linear(patches, params["patch_w"], params["patch_b"])
    tok = tok.reshape(B, n_patches, D)

    cls = jnp.broadcast_to(params["cls_token"], (B, 1, D))
    xseq = jnp.concatenate([cls, tok], axis=1) + params["pos_embed"]

    for blk in params["blocks"]:
        # ONE fused kernel per block: LN1+QKV+MHA+proj+res and LN2+MLP+res.
        xseq = transformer_block(xseq, blk, heads=cfg.heads)

    # backbone head == Identity; cls-token pooling after final norm.
    # LayerNorm is per-token, so norming only the cls token is equivalent.
    # TODO(synk): eps=1e-6 matches timm ViT; plain torch.nn.LayerNorm defaults to 1e-5.
    a_cls = xseq[:, 0, :]                                 # (B, D)
    y_pad = head_block(a_cls, params["norm_g"], params["norm_b"],
                       params["head_w"], params["head_b"])
    return y_pad[:, :cfg.num_classes]                     # VitWarp's self.linear


# ----------------------------------- Main ------------------------------------ #

if __name__ == "__main__":
    key = jax.random.PRNGKey(0)
    k_param, k_x = jax.random.split(key)

    cfg = ViTConfig(img=16, patch=4, in_chans=3, embed_dim=32, depth=2,
                    heads=2, mlp_ratio=4.0, num_classes=10)
    B = 2

    params = init_params(k_param, cfg)
    x = jax.random.normal(k_x, (B, cfg.in_chans, cfg.img, cfg.img),
                          dtype=jnp.float32)

    fwd = jax.jit(functools.partial(vit_warp_forward, cfg=cfg))
    y_hat = fwd(params, x)
    jax.block_until_ready(y_hat)
    assert y_hat.shape == (B, cfg.num_classes)
    assert bool(jnp.all(jnp.isfinite(y_hat)))
    print("KERNEL_OK")
</pallas_src>

<mosaic_0001>
module attributes {stable_mosaic.version = 11 : i64} {
  func.func @_linear_kernel(%arg0: i32, %arg1: memref<16x48xf32, #tpu.memory_space<vmem>>, %arg2: memref<48x32xbf16, #tpu.memory_space<vmem>>, %arg3: memref<1x32xf32, #tpu.memory_space<vmem>>, %arg4: memref<16x32xf32, #tpu.memory_space<vmem>>) attributes {dimension_semantics = [#tpu.dimension_semantics<parallel>], iteration_bounds = array<i64: 2>, scalar_prefetch = 0 : i64, scratch_operands = 0 : i64, tpu.core_type = #tpu.core_type<tc>, window_params = [{transform_indices = @transform_0, window_bounds = array<i64: 16, 48>}, {pipeline_mode = #tpu.pipeline_mode<synchronous>, transform_indices = @transform_1, window_bounds = array<i64: 48, 32>}, {pipeline_mode = #tpu.pipeline_mode<synchronous>, transform_indices = @transform_2, window_bounds = array<i64: 1, 32>}, {transform_indices = @transform_3, window_bounds = array<i64: 16, 32>}]} {
    %c0 = arith.constant 0 : index
    %c0_0 = arith.constant 0 : index
    %0 = vector.load %arg1[%c0, %c0_0] : memref<16x48xf32, #tpu.memory_space<vmem>>, vector<16x48xf32>
    %1 = arith.truncf %0 : vector<16x48xf32> to vector<16x48xbf16>
    %c0_1 = arith.constant 0 : index
    %c0_2 = arith.constant 0 : index
    %2 = vector.load %arg2[%c0_1, %c0_2] : memref<48x32xbf16, #tpu.memory_space<vmem>>, vector<48x32xbf16>
    %cst = arith.constant dense<0.000000e+00> : vector<16x32xf32>
    %3 = tpu.matmul %1, %2, %cst {dimension_numbers = #tpu.dot_dimension_numbers<[1], [0], [0], [1], [0, 0, 1, 1], [], []>} : vector<16x48xbf16>, vector<48x32xbf16>, vector<16x32xf32> -> vector<16x32xf32>
    %c0_3 = arith.constant 0 : index
    %c0_4 = arith.constant 0 : index
    %4 = vector.load %arg3[%c0_3, %c0_4] : memref<1x32xf32, #tpu.memory_space<vmem>>, vector<1x32xf32>
    %5 = vector.broadcast %4 : vector<1x32xf32> to vector<16x32xf32>
    %6 = arith.addf %3, %5 : vector<16x32xf32>
    %c0_5 = arith.constant 0 : index
    %c0_6 = arith.constant 0 : index
    %7 = vector.load %arg4[%c0_5, %c0_6] : memref<16x32xf32, #tpu.memory_space<vmem>>, vector<16x32xf32>
    tpu.vector_store %arg4[%c0_5, %c0_6], %6 {strides = array<i32>} : memref<16x32xf32, #tpu.memory_space<vmem>>, vector<16x32xf32>,
    return
  }
  func.func @transform_0(%arg0: i32) -> (i32, i32) {
    %c0_i32 = arith.constant 0 : i32
    %c0_i32_0 = arith.constant 0 : i32
    return %arg0, %c0_i32 : i32, i32
  }
  func.func @transform_1(%arg0: i32) -> (i32, i32) {
    %c0_i32 = arith.constant 0 : i32
    %c0_i32_0 = arith.constant 0 : i32
    %c0_i32_1 = arith.constant 0 : i32
    return %c0_i32, %c0_i32_0 : i32, i32
  }
  func.func @transform_2(%arg0: i32) -> (i32, i32) {
    %c0_i32 = arith.constant 0 : i32
    %c0_i32_0 = arith.constant 0 : i32
    %c0_i32_1 = arith.constant 0 : i32
    return %c0_i32, %c0_i32_0 : i32, i32
  }
  func.func @transform_3(%arg0: i32) -> (i32, i32) {
    %c0_i32 = arith.constant 0 : i32
    %c0_i32_0 = arith.constant 0 : i32
    return %arg0, %c0_i32 : i32, i32
  }
}

module attributes {stable_mosaic.version = 11 : i64} {
  func.func @_head_kernel(%arg0: memref<2x32xf32, #tpu.memory_space<vmem>>, %arg1: memref<1x32xf32, #tpu.memory_space<vmem>>, %arg2: memref<1x32xf32, #tpu.memory_space<vmem>>, %arg3: memref<32x128xbf16, #tpu.memory_space<vmem>>, %arg4: memref<1x128xf32, #tpu.memory_space<vmem>>, %arg5: memref<2x128xf32, #tpu.memory_space<vmem>>) attributes {dimension_semantics = [], scalar_prefetch = 0 : i64, scratch_operands = 0 : i64, tpu.core_type = #tpu.core_type<tc>} {
    %c0 = arith.constant 0 : index
    %c0_0 = arith.constant 0 : index
    %0 = vector.load %arg0[%c0, %c0_0] : memref<2x32xf32, #tpu.memory_space<vmem>>, vector<2x32xf32>
    %c0_1 = arith.constant 0 : index
    %c0_2 = arith.constant 0 : index
    %1 = vector.load %arg1[%c0_1, %c0_2] : memref<1x32xf32, #tpu.memory_space<vmem>>, vector<1x32xf32>
    %c0_3 = arith.constant 0 : index
    %c0_4 = arith.constant 0 : index
    %2 = vector.load %arg2[%c0_3, %c0_4] : memref<1x32xf32, #tpu.memory_space<vmem>>, vector<1x32xf32>
    %cst = arith.constant dense<0.000000e+00> : vector<2xf32>
    %3 = vector.multi_reduction <add>, %0, %cst [1] : vector<2x32xf32> to vector<2xf32>
    %4 = vector.shape_cast %3 : vector<2xf32> to vector<2x1xf32>
    %cst_5 = arith.constant 3.200000e+01 : f32
    %5 = vector.broadcast %cst_5 : f32 to vector<2x1xf32>
    %6 = arith.divf %4, %5 : vector<2x1xf32>
    %7 = vector.broadcast %6 : vector<2x1xf32> to vector<2x32xf32>
    %8 = arith.subf %0, %7 : vector<2x32xf32>
    %9 = arith.mulf %8, %8 : vector<2x32xf32>
    %cst_6 = arith.constant dense<0.000000e+00> : vector<2xf32>
    %10 = vector.multi_reduction <add>, %9, %cst_6 [1] : vector<2x32xf32> to vector<2xf32>
    %11 = vector.shape_cast %10 : vector<2xf32> to vector<2x1xf32>
    %cst_7 = arith.constant 3.200000e+01 : f32
    %12 = vector.broadcast %cst_7 : f32 to vector<2x1xf32>
    %13 = arith.divf %11, %12 : vector<2x1xf32>
    %cst_8 = arith.constant 9.99999997E-7 : f32
    %14 = vector.broadcast %cst_8 : f32 to vector<2x1xf32>
    %15 = arith.addf %13, %14 : vector<2x1xf32>
    %16 = math.rsqrt %15 : vector<2x1xf32>
    %17 = vector.broadcast %16 : vector<2x1xf32> to vector<2x32xf32>
    %18 = arith.mulf %8, %17 : vector<2x32xf32>
    %19 = vector.broadcast %1 : vector<1x32xf32> to vector<2x32xf32>
    %20 = arith.mulf %18, %19 : vector<2x32xf32>
    %21 = vector.broadcast %2 : vector<1x32xf32> to vector<2x32xf32>
    %22 = arith.addf %20, %21 : vector<2x32xf32>
    %23 = arith.truncf %22 : vector<2x32xf32> to vector<2x32xbf16>
    %c0_9 = arith.constant 0 : index
    %c0_10 = arith.constant 0 : index
    %24 = vector.load %arg3[%c0_9, %c0_10] : memref<32x128xbf16, #tpu.memory_space<vmem>>, vector<32x128xbf16>
    %cst_11 = arith.constant dense<0.000000e+00> : vector<2x128xf32>
    %25 = tpu.matmul %23, %24, %cst_11 {dimension_numbers = #tpu.dot_dimension_numbers<[1], [0], [0], [1], [0, 0, 1, 1], [], []>} : vector<2x32xbf16>, vector<32x128xbf16>, vector<2x128xf32> -> vector<2x128xf32>
    %c0_12 = arith.constant 0 : index
    %c0_13 = arith.constant 0 : index
    %26 = vector.load %arg4[%c0_12, %c0_13] : memref<1x128xf32, #tpu.memory_space<vmem>>, vector<1x128xf32>
    %27 = vector.broadcast %26 : vector<1x128xf32> to vector<2x128xf32>
    %28 = arith.addf %25, %27 : vector<2x128xf32>
    %c0_14 = arith.constant 0 : index
    %c0_15 = arith.constant 0 : index
    %29 = vector.load %arg5[%c0_14, %c0_15] : memref<2x128xf32, #tpu.memory_space<vmem>>, vector<2x128xf32>
    tpu.vector_store %arg5[%c0_14, %c0_15], %28 {strides = array<i32>} : memref<2x128xf32, #tpu.memory_space<vmem>>, vector<2x128xf32>,
    return
  }
}

module attributes {stable_mosaic.version = 11 : i64} {
  func.func @_block_kernel(%arg0: i32, %arg1: memref<1x17x32xf32, #tpu.memory_space<vmem>>, %arg2: memref<1x32xf32, #tpu.memory_space<vmem>>, %arg3: memref<1x32xf32, #tpu.memory_space<vmem>>, %arg4: memref<32x96xbf16, #tpu.memory_space<vmem>>, %arg5: memref<1x96xf32, #tpu.memory_space<vmem>>, %arg6: memref<32x32xbf16, #tpu.memory_space<vmem>>, %arg7: memref<1x32xf32, #tpu.memory_space<vmem>>, %arg8: memref<1x32xf32, #tpu.memory_space<vmem>>, %arg9: memref<1x32xf32, #tpu.memory_space<vmem>>, %arg10: memref<32x128xbf16, #tpu.memory_space<vmem>>, %arg11: memref<1x128xf32, #tpu.memory_space<vmem>>, %arg12: memref<128x32xbf16, #tpu.memory_space<vmem>>, %arg13: memref<1x32xf32, #tpu.memory_space<vmem>>, %arg14: memref<1x17x32xf32, #tpu.memory_space<vmem>>, %arg15: memref<1x17x32xbf16, #tpu.memory_space<vmem>>) attributes {dimension_semantics = [#tpu.dimension_semantics<parallel>], iteration_bounds = array<i64: 2>, scalar_prefetch = 0 : i64, scratch_operands = 1 : i64, tpu.core_type = #tpu.core_type<tc>, window_params = [{transform_indices = @transform_0, window_bounds = array<i64: 1, 17, 32>}, {pipeline_mode = #tpu.pipeline_mode<synchronous>, transform_indices = @transform_1, window_bounds = array<i64: 1, 32>}, {pipeline_mode = #tpu.pipeline_mode<synchronous>, transform_indices = @transform_2, window_bounds = array<i64: 1, 32>}, {pipeline_mode = #tpu.pipeline_mode<synchronous>, transform_indices = @transform_3, window_bounds = array<i64: 32, 96>}, {pipeline_mode = #tpu.pipeline_mode<synchronous>, transform_indices = @transform_4, window_bounds = array<i64: 1, 96>}, {pipeline_mode = #tpu.pipeline_mode<synchronous>, transform_indices = @transform_5, window_bounds = array<i64: 32, 32>}, {pipeline_mode = #tpu.pipeline_mode<synchronous>, transform_indices = @transform_6, window_bounds = array<i64: 1, 32>}, {pipeline_mode = #tpu.pipeline_mode<synchronous>, transform_indices = @transform_7, window_bounds = array<i64: 1, 32>}, {pipeline_mode = #tpu.pipeline_mode<synchronous>, transform_indices = @transform_8, window_bounds = array<i64: 1, 32>}, {pipeline_mode = #tpu.pipeline_mode<synchronous>, transform_indices = @transform_9, window_bounds = array<i64: 32, 128>}, {pipeline_mode = #tpu.pipeline_mode<synchronous>, transform_indices = @transform_10, window_bounds = array<i64: 1, 128>}, {pipeline_mode = #tpu.pipeline_mode<synchronous>, transform_indices = @transform_11, window_bounds = array<i64: 128, 32>}, {pipeline_mode = #tpu.pipeline_mode<synchronous>, transform_indices = @transform_12, window_bounds = array<i64: 1, 32>}, {transform_indices = @transform_13, window_bounds = array<i64: 1, 17, 32>}]} {
    %c0 = arith.constant 0 : index
    %c0_0 = arith.constant 0 : index
    %c0_1 = arith.constant 0 : index
    %0 = vector.load %arg1[%c0, %c0_0, %c0_1] : memref<1x17x32xf32, #tpu.memory_space<vmem>>, vector<1x17x32xf32>
    %1 = vector.shape_cast %0 : vector<1x17x32xf32> to vector<17x32xf32>
    %c0_2 = arith.constant 0 : index
    %c0_3 = arith.constant 0 : index
    %2 = vector.load %arg2[%c0_2, %c0_3] : memref<1x32xf32, #tpu.memory_space<vmem>>, vector<1x32xf32>
    %c0_4 = arith.constant 0 : index
    %c0_5 = arith.constant 0 : index
    %3 = vector.load %arg3[%c0_4, %c0_5] : memref<1x32xf32, #tpu.memory_space<vmem>>, vector<1x32xf32>
    %cst = arith.constant dense<0.000000e+00> : vector<17xf32>
    %4 = vector.multi_reduction <add>, %1, %cst [1] : vector<17x32xf32> to vector<17xf32>
    %5 = vector.shape_cast %4 : vector<17xf32> to vector<17x1xf32>
    %cst_6 = arith.constant 3.200000e+01 : f32
    %6 = vector.broadcast %cst_6 : f32 to vector<17x1xf32>
    %7 = arith.divf %5, %6 : vector<17x1xf32>
    %8 = vector.broadcast %7 : vector<17x1xf32> to vector<17x32xf32>
    %9 = arith.subf %1, %8 : vector<17x32xf32>
    %10 = arith.mulf %9, %9 : vector<17x32xf32>
    %cst_7 = arith.constant dense<0.000000e+00> : vector<17xf32>
    %11 = vector.multi_reduction <add>, %10, %cst_7 [1] : vector<17x32xf32> to vector<17xf32>
    %12 = vector.shape_cast %11 : vector<17xf32> to vector<17x1xf32>
    %cst_8 = arith.constant 3.200000e+01 : f32
    %13 = vector.broadcast %cst_8 : f32 to vector<17x1xf32>
    %14 = arith.divf %12, %13 : vector<17x1xf32>
    %cst_9 = arith.constant 9.99999997E-7 : f32
    %15 = vector.broadcast %cst_9 : f32 to vector<17x1xf32>
    %16 = arith.addf %14, %15 : vector<17x1xf32>
    %17 = math.rsqrt %16 : vector<17x1xf32>
    %18 = vector.broadcast %17 : vector<17x1xf32> to vector<17x32xf32>
    %19 = arith.mulf %9, %18 : vector<17x32xf32>
    %20 = vector.broadcast %2 : vector<1x32xf32> to vector<17x32xf32>
    %21 = arith.mulf %19, %20 : vector<17x32xf32>
    %22 = vector.broadcast %3 : vector<1x32xf32> to vector<17x32xf32>
    %23 = arith.addf %21, %22 : vector<17x32xf32>
    %24 = arith.truncf %23 : vector<17x32xf32> to vector<17x32xbf16>
    %c0_10 = arith.constant 0 : index
    %c0_11 = arith.constant 0 : index
    %25 = vector.load %arg4[%c0_10, %c0_11] : memref<32x96xbf16, #tpu.memory_space<vmem>>, vector<32x96xbf16>
    %cst_12 = arith.constant dense<0.000000e+00> : vector<17x96xf32>
    %26 = tpu.matmul %24, %25, %cst_12 {dimension_numbers = #tpu.dot_dimension_numbers<[1], [0], [0], [1], [0, 0, 1, 1], [], []>} : vector<17x32xbf16>, vector<32x96xbf16>, vector<17x96xf32> -> vector<17x96xf32>
    %c0_13 = arith.constant 0 : index
    %c0_14 = arith.constant 0 : index
    %27 = vector.load %arg5[%c0_13, %c0_14] : memref<1x96xf32, #tpu.memory_space<vmem>>, vector<1x96xf32>
    %28 = vector.broadcast %27 : vector<1x96xf32> to vector<17x96xf32>
    %29 = arith.addf %26, %28 : vector<17x96xf32>
    %30 = vector.shape_cast %29 : vector<17x96xf32> to vector<1x17x96xf32>
    %31 = vector.extract_strided_slice %30 {offsets = [0, 0, 0], sizes = [1, 17, 16], strides = [1, 1, 1]} : vector<1x17x96xf32> to vector<1x17x16xf32>
    %cst_15 = arith.constant 2.500000e-01 : f32
    %32 = vector.broadcast %cst_15 : f32 to vector<1x17x16xf32>
    %33 = arith.mulf %31, %32 : vector<1x17x16xf32>
    %34 = vector.extract_strided_slice %30 {offsets = [0, 0, 32], sizes = [1, 17, 16], strides = [1, 1, 1]} : vector<1x17x96xf32> to vector<1x17x16xf32>
    %35 = vector.extract_strided_slice %30 {offsets = [0, 0, 64], sizes = [1, 17, 16], strides = [1, 1, 1]} : vector<1x17x96xf32> to vector<1x17x16xf32>
    %36 = arith.truncf %33 : vector<1x17x16xf32> to vector<1x17x16xbf16>
    %37 = arith.truncf %34 : vector<1x17x16xf32> to vector<1x17x16xbf16>
    "tpu.trace_start"() <{level = 10 : i32, message = "bqd,bkd->bqk"}> : () -> ()
    %cst_16 = arith.constant dense<0.000000e+00> : vector<1x17x17xf32>
    %38 = tpu.matmul %36, %37, %cst_16 {dimension_numbers = #tpu.dot_dimension_numbers<[2], [2], [1], [1], [0, 0, 0, 1, 1, 1], [0], [0]>} : vector<1x17x16xbf16>, vector<1x17x16xbf16>, vector<1x17x17xf32> -> vector<1x17x17xf32>
    "tpu.trace_stop"() : () -> ()
    %cst_17 = arith.constant dense<0xFF800000> : vector<1x17xf32>
    %39 = vector.multi_reduction <maximumf>, %38, %cst_17 [2] : vector<1x17x17xf32> to vector<1x17xf32>
    %40 = vector.shape_cast %39 : vector<1x17xf32> to vector<1x17x1xf32>
    %41 = vector.broadcast %40 : vector<1x17x1xf32> to vector<1x17x17xf32>
    %42 = arith.subf %38, %41 : vector<1x17x17xf32>
    %43 = math.exp %42 : vector<1x17x17xf32>
    %cst_18 = arith.constant dense<0.000000e+00> : vector<1x17xf32>
    %44 = vector.multi_reduction <add>, %43, %cst_18 [2] : vector<1x17x17xf32> to vector<1x17xf32>
    %45 = vector.shape_cast %44 : vector<1x17xf32> to vector<1x17x1xf32>
    %46 = tpu.reciprocal %45 {approx = true} : vector<1x17x1xf32> -> vector<1x17x1xf32>
    %47 = vector.broadcast %46 : vector<1x17x1xf32> to vector<1x17x17xf32>
    %48 = arith.mulf %43, %47 : vector<1x17x17xf32>
    %49 = arith.truncf %48 : vector<1x17x17xf32> to vector<1x17x17xbf16>
    %50 = arith.truncf %35 : vector<1x17x16xf32> to vector<1x17x16xbf16>
    "tpu.trace_start"() <{level = 10 : i32, message = "bqk,bkd->bqd"}> : () -> ()
    %cst_19 = arith.constant dense<0.000000e+00> : vector<1x17x16xf32>
    %51 = tpu.matmul %49, %50, %cst_19 {dimension_numbers = #tpu.dot_dimension_numbers<[2], [1], [1], [2], [0, 0, 0, 1, 1, 2], [0], [0]>} : vector<1x17x17xbf16>, vector<1x17x16xbf16>, vector<1x17x16xf32> -> vector<1x17x16xf32>
    "tpu.trace_stop"() : () -> ()
    %52 = arith.truncf %51 : vector<1x17x16xf32> to vector<1x17x16xbf16>
    %c0_20 = arith.constant 0 : index
    %c0_21 = arith.constant 0 : index
    %c0_22 = arith.constant 0 : index
    %53 = vector.load %arg15[%c0_20, %c0_21, %c0_22] : memref<1x17x32xbf16, #tpu.memory_space<vmem>>, vector<1x17x16xbf16>
    tpu.vector_store %arg15[%c0_20, %c0_21, %c0_22], %52 {strides = array<i32>} : memref<1x17x32xbf16, #tpu.memory_space<vmem>>, vector<1x17x16xbf16>,
    %54 = vector.extract_strided_slice %30 {offsets = [0, 0, 16], sizes = [1, 17, 16], strides = [1, 1, 1]} : vector<1x17x96xf32> to vector<1x17x16xf32>
    %cst_23 = arith.constant 2.500000e-01 : f32
    %55 = vector.broadcast %cst_23 : f32 to vector<1x17x16xf32>
    %56 = arith.mulf %54, %55 : vector<1x17x16xf32>
    %57 = vector.extract_strided_slice %30 {offsets = [0, 0, 48], sizes = [1, 17, 16], strides = [1, 1, 1]} : vector<1x17x96xf32> to vector<1x17x16xf32>
    %58 = vector.extract_strided_slice %30 {offsets = [0, 0, 80], sizes = [1, 17, 16], strides = [1, 1, 1]} : vector<1x17x96xf32> to vector<1x17x16xf32>
    %59 = arith.truncf %56 : vector<1x17x16xf32> to vector<1x17x16xbf16>
    %60 = arith.truncf %57 : vector<1x17x16xf32> to vector<1x17x16xbf16>
    "tpu.trace_start"() <{level = 10 : i32, message = "bqd,bkd->bqk"}> : () -> ()
    %cst_24 = arith.constant dense<0.000000e+00> : vector<1x17x17xf32>
    %61 = tpu.matmul %59, %60, %cst_24 {dimension_numbers = #tpu.dot_dimension_numbers<[2], [2], [1], [1], [0, 0, 0, 1, 1, 1], [0], [0]>} : vector<1x17x16xbf16>, vector<1x17x16xbf16>, vector<1x17x17xf32> -> vector<1x17x17xf32>
    "tpu.trace_stop"() : () -> ()
    %cst_25 = arith.constant dense<0xFF800000> : vector<1x17xf32>
    %62 = vector.multi_reduction <maximumf>, %61, %cst_25 [2] : vector<1x17x17xf32> to vector<1x17xf32>
    %63 = vector.shape_cast %62 : vector<1x17xf32> to vector<1x17x1xf32>
    %64 = vector.broadcast %63 : vector<1x17x1xf32> to vector<1x17x17xf32>
    %65 = arith.subf %61, %64 : vector<1x17x17xf32>
    %66 = math.exp %65 : vector<1x17x17xf32>
    %cst_26 = arith.constant dense<0.000000e+00> : vector<1x17xf32>
    %67 = vector.multi_reduction <add>, %66, %cst_26 [2] : vector<1x17x17xf32> to vector<1x17xf32>
    %68 = vector.shape_cast %67 : vector<1x17xf32> to vector<1x17x1xf32>
    %69 = tpu.reciprocal %68 {approx = true} : vector<1x17x1xf32> -> vector<1x17x1xf32>
    %70 = vector.broadcast %69 : vector<1x17x1xf32> to vector<1x17x17xf32>
    %71 = arith.mulf %66, %70 : vector<1x17x17xf32>
    %72 = arith.truncf %71 : vector<1x17x17xf32> to vector<1x17x17xbf16>
    %73 = arith.truncf %58 : vector<1x17x16xf32> to vector<1x17x16xbf16>
    "tpu.trace_start"() <{level = 10 : i32, message = "bqk,bkd->bqd"}> : () -> ()
    %cst_27 = arith.constant dense<0.000000e+00> : vector<1x17x16xf32>
    %74 = tpu.matmul %72, %73, %cst_27 {dimension_numbers = #tpu.dot_dimension_numbers<[2], [1], [1], [2], [0, 0, 0, 1, 1, 2], [0], [0]>} : vector<1x17x17xbf16>, vector<1x17x16xbf16>, vector<1x17x16xf32> -> vector<1x17x16xf32>
    "tpu.trace_stop"() : () -> ()
    %75 = arith.truncf %74 : vector<1x17x16xf32> to vector<1x17x16xbf16>
    %c0_28 = arith.constant 0 : index
    %c0_29 = arith.constant 0 : index
    %c16 = arith.constant 16 : index
    %76 = vector.load %arg15[%c0_28, %c0_29, %c16] : memref<1x17x32xbf16, #tpu.memory_space<vmem>>, vector<1x17x16xbf16>
    tpu.vector_store %arg15[%c0_28, %c0_29, %c16], %75 {strides = array<i32>} : memref<1x17x32xbf16, #tpu.memory_space<vmem>>, vector<1x17x16xbf16>,
    %c0_30 = arith.constant 0 : index
    %c0_31 = arith.constant 0 : index
    %c0_32 = arith.constant 0 : index
    %77 = vector.load %arg15[%c0_30, %c0_31, %c0_32] : memref<1x17x32xbf16, #tpu.memory_space<vmem>>, vector<1x17x32xbf16>
    %78 = vector.shape_cast %77 : vector<1x17x32xbf16> to vector<17x32xbf16>
    %c0_33 = arith.constant 0 : index
    %c0_34 = arith.constant 0 : index
    %79 = vector.load %arg6[%c0_33, %c0_34] : memref<32x32xbf16, #tpu.memory_space<vmem>>, vector<32x32xbf16>
    %cst_35 = arith.constant dense<0.000000e+00> : vector<17x32xf32>
    %80 = tpu.matmul %78, %79, %cst_35 {dimension_numbers = #tpu.dot_dimension_numbers<[1], [0], [0], [1], [0, 0, 1, 1], [], []>} : vector<17x32xbf16>, vector<32x32xbf16>, vector<17x32xf32> -> vector<17x32xf32>
    %c0_36 = arith.constant 0 : index
    %c0_37 = arith.constant 0 : index
    %81 = vector.load %arg7[%c0_36, %c0_37] : memref<1x32xf32, #tpu.memory_space<vmem>>, vector<1x32xf32>
    %82 = vector.broadcast %81 : vector<1x32xf32> to vector<17x32xf32>
    %83 = arith.addf %80, %82 : vector<17x32xf32>
    %84 = arith.addf %1, %83 : vector<17x32xf32>
    %c0_38 = arith.constant 0 : index
    %c0_39 = arith.constant 0 : index
    %85 = vector.load %arg8[%c0_38, %c0_39] : memref<1x32xf32, #tpu.memory_space<vmem>>, vector<1x32xf32>
    %c0_40 = arith.constant 0 : index
    %c0_41 = arith.constant 0 : index
    %86 = vector.load %arg9[%c0_40, %c0_41] : memref<1x32xf32, #tpu.memory_space<vmem>>, vector<1x32xf32>
    %cst_42 = arith.constant dense<0.000000e+00> : vector<17xf32>
    %87 = vector.multi_reduction <add>, %84, %cst_42 [1] : vector<17x32xf32> to vector<17xf32>
    %88 = vector.shape_cast %87 : vector<17xf32> to vector<17x1xf32>
    %cst_43 = arith.constant 3.200000e+01 : f32
    %89 = vector.broadcast %cst_43 : f32 to vector<17x1xf32>
    %90 = arith.divf %88, %89 : vector<17x1xf32>
    %91 = vector.broadcast %90 : vector<17x1xf32> to vector<17x32xf32>
    %92 = arith.subf %84, %91 : vector<17x32xf32>
    %93 = arith.mulf %92, %92 : vector<17x32xf32>
    %cst_44 = arith.constant dense<0.000000e+00> : vector<17xf32>
    %94 = vector.multi_reduction <add>, %93, %cst_44 [1] : vector<17x32xf32> to vector<17xf32>
    %95 = vector.shape_cast %94 : vector<17xf32> to vector<17x1xf32>
    %cst_45 = arith.constant 3.200000e+01 : f32
    %96 = vector.broadcast %cst_45 : f32 to vector<17x1xf32>
    %97 = arith.divf %95, %96 : vector<17x1xf32>
    %cst_46 = arith.constant 9.99999997E-7 : f32
    %98 = vector.broadcast %cst_46 : f32 to vector<17x1xf32>
    %99 = arith.addf %97, %98 : vector<17x1xf32>
    %100 = math.rsqrt %99 : vector<17x1xf32>
    %101 = vector.broadcast %100 : vector<17x1xf32> to vector<17x32xf32>
    %102 = arith.mulf %92, %101 : vector<17x32xf32>
    %103 = vector.broadcast %85 : vector<1x32xf32> to vector<17x32xf32>
    %104 = arith.mulf %102, %103 : vector<17x32xf32>
    %105 = vector.broadcast %86 : vector<1x32xf32> to vector<17x32xf32>
    %106 = arith.addf %104, %105 : vector<17x32xf32>
    %107 = arith.truncf %106 : vector<17x32xf32> to vector<17x32xbf16>
    %c0_47 = arith.constant 0 : index
    %c0_48 = arith.constant 0 : index
    %108 = vector.load %arg10[%c0_47, %c0_48] : memref<32x128xbf16, #tpu.memory_space<vmem>>, vector<32x128xbf16>
    %cst_49 = arith.constant dense<0.000000e+00> : vector<17x128xf32>
    %109 = tpu.matmul %107, %108, %cst_49 {dimension_numbers = #tpu.dot_dimension_numbers<[1], [0], [0], [1], [0, 0, 1, 1], [], []>} : vector<17x32xbf16>, vector<32x128xbf16>, vector<17x128xf32> -> vector<17x128xf32>
    %c0_50 = arith.constant 0 : index
    %c0_51 = arith.constant 0 : index
    %110 = vector.load %arg11[%c0_50, %c0_51] : memref<1x128xf32, #tpu.memory_space<vmem>>, vector<1x128xf32>
    %111 = vector.broadcast %110 : vector<1x128xf32> to vector<17x128xf32>
    %112 = arith.addf %109, %111 : vector<17x128xf32>
    %cst_52 = arith.constant 5.000000e-01 : f32
    %113 = vector.broadcast %cst_52 : f32 to vector<17x128xf32>
    %114 = arith.mulf %113, %112 : vector<17x128xf32>
    %cst_53 = arith.constant 4.471500e-02 : f32
    %115 = vector.broadcast %cst_53 : f32 to vector<17x128xf32>
    %116 = arith.mulf %115, %112 : vector<17x128xf32>
    %117 = arith.mulf %116, %112 : vector<17x128xf32>
    %118 = arith.mulf %117, %112 : vector<17x128xf32>
    %119 = arith.addf %112, %118 : vector<17x128xf32>
    %cst_54 = arith.constant 0.797884583 : f32
    %120 = vector.broadcast %cst_54 : f32 to vector<17x128xf32>
    %121 = arith.mulf %120, %119 : vector<17x128xf32>
    %122 = math.tanh %121 : vector<17x128xf32>
    %cst_55 = arith.constant 1.000000e+00 : f32
    %123 = vector.broadcast %cst_55 : f32 to vector<17x128xf32>
    %124 = arith.addf %123, %122 : vector<17x128xf32>
    %125 = arith.mulf %114, %124 : vector<17x128xf32>
    %126 = arith.truncf %125 : vector<17x128xf32> to vector<17x128xbf16>
    %c0_56 = arith.constant 0 : index
    %c0_57 = arith.constant 0 : index
    %127 = vector.load %arg12[%c0_56, %c0_57] : memref<128x32xbf16, #tpu.memory_space<vmem>>, vector<128x32xbf16>
    %cst_58 = arith.constant dense<0.000000e+00> : vector<17x32xf32>
    %128 = tpu.matmul %126, %127, %cst_58 {dimension_numbers = #tpu.dot_dimension_numbers<[1], [0], [0], [1], [0, 0, 1, 1], [], []>} : vector<17x128xbf16>, vector<128x32xbf16>, vector<17x32xf32> -> vector<17x32xf32>
    %c0_59 = arith.constant 0 : index
    %c0_60 = arith.constant 0 : index
    %129 = vector.load %arg13[%c0_59, %c0_60] : memref<1x32xf32, #tpu.memory_space<vmem>>, vector<1x32xf32>
    %130 = vector.broadcast %129 : vector<1x32xf32> to vector<17x32xf32>
    %131 = arith.addf %128, %130 : vector<17x32xf32>
    %132 = arith.addf %84, %131 : vector<17x32xf32>
    %133 = vector.shape_cast %132 : vector<17x32xf32> to vector<1x17x32xf32>
    %c0_61 = arith.constant 0 : index
    %c0_62 = arith.constant 0 : index
    %c0_63 = arith.constant 0 : index
    %134 = vector.load %arg14[%c0_61, %c0_62, %c0_63] : memref<1x17x32xf32, #tpu.memory_space<vmem>>, vector<1x17x32xf32>
    tpu.vector_store %arg14[%c0_61, %c0_62, %c0_63], %133 {strides = array<i32>} : memref<1x17x32xf32, #tpu.memory_space<vmem>>, vector<1x17x32xf32>,
    return
  }
  func.func @transform_0(%arg0: i32) -> (i32, i32, i32) {
    %c0_i32 = arith.constant 0 : i32
    %c0_i32_0 = arith.constant 0 : i32
    %c0_i32_1 = arith.constant 0 : i32
    return %arg0, %c0_i32, %c0_i32_0 : i32, i32, i32
  }
  func.func @transform_1(%arg0: i32) -> (i32, i32) {
    %c0_i32 = arith.constant 0 : i32
    %c0_i32_0 = arith.constant 0 : i32
    %c0_i32_1 = arith.constant 0 : i32
    return %c0_i32, %c0_i32_0 : i32, i32
  }
  func.func @transform_2(%arg0: i32) -> (i32, i32) {
    %c0_i32 = arith.constant 0 : i32
    %c0_i32_0 = arith.constant 0 : i32
    %c0_i32_1 = arith.constant 0 : i32
    return %c0_i32, %c0_i32_0 : i32, i32
  }
  func.func @transform_3(%arg0: i32) -> (i32, i32) {
    %c0_i32 = arith.constant 0 : i32
    %c0_i32_0 = arith.constant 0 : i32
    %c0_i32_1 = arith.constant 0 : i32
    return %c0_i32, %c0_i32_0 : i32, i32
  }
  func.func @transform_4(%arg0: i32) -> (i32, i32) {
    %c0_i32 = arith.constant 0 : i32
    %c0_i32_0 = arith.constant 0 : i32
    %c0_i32_1 = arith.constant 0 : i32
    return %c0_i32, %c0_i32_0 : i32, i32
  }
  func.func @transform_5(%arg0: i32) -> (i32, i32) {
    %c0_i32 = arith.constant 0 : i32
    %c0_i32_0 = arith.constant 0 : i32
    %c0_i32_1 = arith.constant 0 : i32
    return %c0_i32, %c0_i32_0 : i32, i32
  }
  func.func @transform_6(%arg0: i32) -> (i32, i32) {
    %c0_i32 = arith.constant 0 : i32
    %c0_i32_0 = arith.constant 0 : i32
    %c0_i32_1 = arith.constant 0 : i32
    return %c0_i32, %c0_i32_0 : i32, i32
  }
  func.func @transform_7(%arg0: i32) -> (i32, i32) {
    %c0_i32 = arith.constant 0 : i32
    %c0_i32_0 = arith.constant 0 : i32
    %c0_i32_1 = arith.constant 0 : i32
    return %c0_i32, %c0_i32_0 : i32, i32
  }
  func.func @transform_8(%arg0: i32) -> (i32, i32) {
    %c0_i32 = arith.constant 0 : i32
    %c0_i32_0 = arith.constant 0 : i32
    %c0_i32_1 = arith.constant 0 : i32
    return %c0_i32, %c0_i32_0 : i32, i32
  }
  func.func @transform_9(%arg0: i32) -> (i32, i32) {
    %c0_i32 = arith.constant 0 : i32
    %c0_i32_0 = arith.constant 0 : i32
    %c0_i32_1 = arith.constant 0 : i32
    return %c0_i32, %c0_i32_0 : i32, i32
  }
  func.func @transform_10(%arg0: i32) -> (i32, i32) {
    %c0_i32 = arith.constant 0 : i32
    %c0_i32_0 = arith.constant 0 : i32
    %c0_i32_1 = arith.constant 0 : i32
    return %c0_i32, %c0_i32_0 : i32, i32
  }
  func.func @transform_11(%arg0: i32) -> (i32, i32) {
    %c0_i32 = arith.constant 0 : i32
    %c0_i32_0 = arith.constant 0 : i32
    %c0_i32_1 = arith.constant 0 : i32
    return %c0_i32, %c0_i32_0 : i32, i32
  }
  func.func @transform_12(%arg0: i32) -> (i32, i32) {
    %c0_i32 = arith.constant 0 : i32
    %c0_i32_0 = arith.constant 0 : i32
    %c0_i32_1 = arith.constant 0 : i32
    return %c0_i32, %c0_i32_0 : i32, i32
  }
  func.func @transform_13(%arg0: i32) -> (i32, i32, i32) {
    %c0_i32 = arith.constant 0 : i32
    %c0_i32_0 = arith.constant 0 : i32
    %c0_i32_1 = arith.constant 0 : i32
    return %arg0, %c0_i32, %c0_i32_0 : i32, i32, i32
  }
}

</mosaic_0001>

<llo_original>
// kernel: vit_warp_forward.4
$region0: #{vit_warp_forward.4}
  #allocation0 [shape = 'u32[]', space=smem, size = 0x4, offset = 0x4, fixed_abs, tag = 'smem constant byte address 0x4 - core index']
  #allocation1 [shape = 'u32[144,128]{1,0:T(1,128)}', space=vmem, size = 0x12000, scoped, tag = 'internal scratch']
  %s0 = inlined_call_operand.vmem [shape: f32[32,48], index: 0, kind: input, shape index: {}]
  %s1 = inlined_call_operand.vmem [shape: bf16[48,32], index: 1, kind: input, shape index: {}]
  %s2 = inlined_call_operand.vmem [shape: f32[1,32], index: 2, kind: input, shape index: {}]
  %s3 = inlined_call_operand.vmem [shape: f32[32,32], index: 3, kind: output, shape index: {}]
  %s4 = sld [smem:[#allocation0]]
  $region45: #{vit_warp_forward.4} parent=0
    _
  %s6 = ssub.s32 1, %s4
  %s7 = scalar_select 0, %s6, %s4
  loop: start=0, step=1, limit=4
  $region2: #{vit_warp_forward.4} parent=0 // loop_pre_header
    _
  $region3: #{vit_warp_forward.4} parent=0 // loop_header
    %s9 = sphi 0, %s13
    %p10 = scmp.ge.s32.totalorder %s9, 4
    %s19 = sphi 0, %s21
    %s22 = sphi 0, %s19
    %s23 = sphi 0, %s22
    %s39 = sphi 0, %s23
    %s43 = sphi 0, %s43
    %s45 = sphi 0, %s43
    %s46 = sphi 0, %s45
    %s60 = sphi 0, %s46
    %s64 = sphi 0, %s64
    %s66 = sphi 0, %s64
    %s67 = sphi 0, %s66
    %s81 = sphi 0, %s67
    %s87 = sphi 0, %s89
    %s90 = sphi 0, %s87
    %s91 = sphi 0, %s90
    %s107 = sphi 0, %s91
  $region4: #{vit_warp_forward.4} parent=0 // loop_header_branch
    %12 = sbr.rel (%p10) target = $region8
  $region5: #{vit_warp_forward.4} parent=0 // loop_body
    %s14 = ssub.s32 %s9, 1
    %s15 = ssub.s32 %s9, 2
    %s16 = sadd.s32 %s9, 1
    %s17 = ssub.s32 %s9, %s16
    %p18 = scmp.eq.s32.totalorder %s17, 0
    %s20 = sadd.s32 %s19, 1
    %s21 = scalar_select %p18, %s19, %s20
    %p24 = pneg %p18
    %p25 = scmp.eq.s32.totalorder %s9, 1
    %p26 = por %p24, %p25
    %p27 = scmp.ne.s32.totalorder %s19, %s22
    %p28 = scmp.eq.s32.totalorder %s9, 0
    %p29 = por %p27, %p28
    %p30 = scmp.ne.s32.totalorder %s19, %s22
    %p31 = scmp.eq.s32.totalorder %s14, 1
    %p32 = por %p30, %p31
    %p33 = scmp.ne.s32.totalorder %s22, %s23
    %p34 = scmp.eq.s32.totalorder %s14, 0
    %p35 = por %p33, %p34
    %p36 = scmp.ne.s32.totalorder %s22, %s23
    %p37 = scmp.eq.s32.totalorder %s15, 1
    %p38 = por %p36, %p37
    %p40 = scmp.ne.s32.totalorder %s23, %s39
    %p41 = scmp.eq.s32.totalorder %s15, 0
    %p42 = por %p40, %p41
    %s44 = sadd.s32 %s43, 1
    %p47 = scmp.eq.s32.totalorder %s9, 1
    %p48 = scmp.ne.s32.totalorder %s43, %s45
    %p49 = scmp.eq.s32.totalorder %s9, 0
    %p50 = por %p48, %p49
    %p51 = scmp.ne.s32.totalorder %s43, %s45
    %p52 = scmp.eq.s32.totalorder %s14, 1
    %p53 = por %p51, %p52
    %p54 = scmp.ne.s32.totalorder %s45, %s46
    %p55 = scmp.eq.s32.totalorder %s14, 0
    %p56 = por %p54, %p55
    %p57 = scmp.ne.s32.totalorder %s45, %s46
    %p58 = scmp.eq.s32.totalorder %s15, 1
    %p59 = por %p57, %p58
    %p61 = scmp.ne.s32.totalorder %s46, %s60
    %p62 = scmp.eq.s32.totalorder %s15, 0
    %p63 = por %p61, %p62
    %s65 = sadd.s32 %s64, 1
    %p68 = scmp.eq.s32.totalorder %s9, 1
    %p69 = scmp.ne.s32.totalorder %s64, %s66
    %p70 = scmp.eq.s32.totalorder %s9, 0
    %p71 = por %p69, %p70
    %p72 = scmp.ne.s32.totalorder %s64, %s66
    %p73 = scmp.eq.s32.totalorder %s14, 1
    %p74 = por %p72, %p73
    %p75 = scmp.ne.s32.totalorder %s66, %s67
    %p76 = scmp.eq.s32.totalorder %s14, 0
    %p77 = por %p75, %p76
    %p78 = scmp.ne.s32.totalorder %s66, %s67
    %p79 = scmp.eq.s32.totalorder %s15, 1
    %p80 = por %p78, %p79
    %p82 = scmp.ne.s32.totalorder %s67, %s81
    %p83 = scmp.eq.s32.totalorder %s15, 0
    %p84 = por %p82, %p83
    %s85 = ssub.s32 %s9, %s16
    %p86 = scmp.eq.s32.totalorder %s85, 0
    %s88 = sadd.s32 %s87, 1
    %s89 = scalar_select %p86, %s87, %s88
    %p92 = pneg %p86
    %p93 = scmp.eq.s32.totalorder %s9, 1
    %p94 = por %p92, %p93
    %p95 = scmp.ne.s32.totalorder %s87, %s90
    %p96 = scmp.eq.s32.totalorder %s9, 0
    %p97 = por %p95, %p96
    %p98 = scmp.ne.s32.totalorder %s87, %s90
    %p99 = scmp.eq.s32.totalorder %s14, 1
    %p100 = por %p98, %p99
    %p101 = scmp.ne.s32.totalorder %s90, %s91
    %p102 = scmp.eq.s32.totalorder %s14, 0
    %p103 = por %p101, %p102
    %p104 = scmp.ne.s32.totalorder %s90, %s91
    %p105 = scmp.eq.s32.totalorder %s15, 1
    %p106 = por %p104, %p105
    %p108 = scmp.ne.s32.totalorder %s91, %s107
    %p109 = scmp.eq.s32.totalorder %s15, 0
    %p110 = por %p108, %p109
    %p111 = scmp.le.s32.totalorder 1, %s9
    %p112 = scmp.lt.s32.totalorder %s9, 3
    %p113 = pnand %p111, %p112
    %p114 = pneg %p113
    // Predicated region
    $region9: #{vit_warp_forward.4} parent=5 // pred_check
      _
    $region10: #{vit_warp_forward.4} parent=5 // pred_check_branch
      %116 = sbr.rel (%p113) target = $region12
    $region11: #{vit_warp_forward.4} parent=5 // pred_region
      %s117 = ssub.s32 %s9, 1
      // Predicated region
      $region13: #{vit_warp_forward.4} parent=11 // pred_check
        %p118 = pneg %p56
      $region14: #{vit_warp_forward.4} parent=11 // pred_check_branch
        %120 = sbr.rel (%p118) target = $region16
      $region15: #{vit_warp_forward.4} parent=11 // pred_region
        _
      $region16: #{vit_warp_forward.4} parent=11 // pred_fallthru
        _
      // Predicated region
      $region17: #{vit_warp_forward.4} parent=11 // pred_check
        %p121 = pneg %p77
      $region18: #{vit_warp_forward.4} parent=11 // pred_check_branch
        %123 = sbr.rel (%p121) target = $region20
      $region19: #{vit_warp_forward.4} parent=11 // pred_region
        _
      $region20: #{vit_warp_forward.4} parent=11 // pred_fallthru
        _
    $region12: #{vit_warp_forward.4} parent=5 // pred_fallthru
      _
    %p124 = scmp.lt.s32.totalorder %s9, 2
    // Predicated region
    $region21: #{vit_warp_forward.4} parent=5 // pred_check
      %p125 = pneg %p124
    $region22: #{vit_warp_forward.4} parent=5 // pred_check_branch
      %127 = sbr.rel (%p125) target = $region24
    $region23: #{vit_warp_forward.4} parent=5 // pred_region
      // Predicated region
      $region25: #{vit_warp_forward.4} parent=23 // pred_check
        %p128 = pneg %p29
      $region26: #{vit_warp_forward.4} parent=23 // pred_check_branch
        %130 = sbr.rel (%p128) target = $region28
      $region27: #{vit_warp_forward.4} parent=23 // pred_region
        %s131 = smul.u32 2, %s9
        %p132 = scmp.lt.s32.totalorder %s131, 3
        %s133 = scalar_select %p132, %s131, 3
        %s134 = smul.addr %s133, 8
        %s135 = scalar_lea.vmem %s0, %s134
        %s136 = smul.u32 2, %s9
      $region28: #{vit_warp_forward.4} parent=23 // pred_fallthru
        _
    $region24: #{vit_warp_forward.4} parent=5 // pred_fallthru
      _
    %p137 = scmp.le.s32.totalorder 1, %s9
    %p138 = scmp.lt.s32.totalorder %s9, 3
    %p139 = pnand %p137, %p138
    %p140 = pneg %p139
    // Predicated region
    $region29: #{vit_warp_forward.4} parent=5 // pred_check
      _
    $region30: #{vit_warp_forward.4} parent=5 // pred_check_branch
      %142 = sbr.rel (%p139) target = $region32
    $region31: #{vit_warp_forward.4} parent=5 // pred_region
      %s143 = ssub.s32 %s9, 1
      %s144 = smul.u32 2, %s14
      %p145 = scmp.lt.s32.totalorder %s144, 3
      %s146 = scalar_select %p145, %s144, 3
      %s147 = smul.addr %s146, 8
      %s148 = scalar_lea.vmem %s0, %s147
      %p149 = pneg %p35
      %p150 = pneg %p32
      %p151 = pneg %p56
      %p152 = pneg %p53
      %p153 = pneg %p77
      %p154 = pneg %p74
      %p155 = pneg %p103
      %p156 = pneg %p100
      %s157 = smul.u32 2, %s14
      %p158 = scmp.lt.s32.totalorder %s157, 3
      %s159 = scalar_select %p158, %s157, 3
      %s160 = smul.addr %s159, 8
      %s161 = scalar_lea.vmem %s3, %s160
      %s162 = smul.u32 2, %s14
      %p163 = scmp.lt.s32.totalorder %s162, 3
      %s164 = scalar_select %p163, %s162, 3
      %s165 = smul.addr %s164, 8
      %s166 = scalar_lea.vmem %s0, %s165
      %s167 = smul.u32 2, %s14
      %s168 = smul.u32 2, %s14
      %p169 = scmp.lt.s32.totalorder %s168, 3
      %s170 = scalar_select %p169, %s168, 3
      %s171 = smul.addr %s170, 8
      %s172 = scalar_lea.vmem %s3, %s171
      %s173 = smul.u32 2, %s14
      %v175 = vld [vmem:[%s166] sm:$0xff]
      %v176 = vld [vmem:[%s166 + $0x8] sm:$0xff]
      %v177 = vpack.c.bf16 %v176, %v175
      %v178 = vld [vmem:[%s1] sm:$0xf]
      %v179 = vld [vmem:[%s1 + $0x4] sm:$0xf]
      %v180 = vld [vmem:[%s1 + $0x8] sm:$0xf]
      %v181 = vld [vmem:[%s1 + $0xc] sm:$0xf]
      %v182 = vld [vmem:[%s1 + $0x10] sm:$0xf]
      %v183 = vld [vmem:[%s1 + $0x14] sm:$0xf]
      %v184 = vld [vmem:[%s2] sm:$0x1]
      %v186 = vlaneseq
      %v187 = vshrl.u32 %v186, 7
      %v188 = vsub.s32 0, %v187
      %v189 = vrot.slane %v184, %v188
      %v197 = vunpack.c.l.b16 %v178
      %v198 = vunpack.c.l.b16 %v179
      %v199 = vunpack.c.l.b16 %v180
      %v200 = vunpack.c.l.b16 %v181
      %v201 = vunpack.c.l.b16 %v182
      %v202 = vunpack.c.l.b16 %v183
      %v203 = vpack.c.b16 %v198, %v197
      %v204 = vpack.c.b16 %v200, %v199
      %v205 = vpack.c.b16 %v202, %v201
      %vm209 = vcmask 392192
      %v211 = vsel %vm209, %v177, 0
      %213 = vmatprep.subr.bf16.mxu0 0
      %214 = vmatpush1.bf16.msra.mxu0 %v203
      %215 = vmatprep.subr.bf16.mxu0 0
      %216 = vmatpush1.bf16.msra.mxu0 %v204
      %217 = vmatprep.subr.bf16.mxu0 0
      %218 = vmatpush1.bf16.msra.mxu0 %v205
      %219 = vmatprep.subr.bf16.mxu0 0
      %220 = vmatpush1.bf16.msra.mxu0 0
      %221 = vmatprep.subr.bf16.mxu0 0
      %222 = vmatpush1.bf16.msra.mxu0 0
      %223 = vmatprep.subr.bf16.mxu0 0
      %224 = vmatpush1.bf16.msra.mxu0 0
      %225 = vmatprep.subr.bf16.mxu0 0
      %226 = vmatpush1.bf16.msra.mxu0 0
      %227 = vmatprep.subr.bf16.mxu0 0
      %228 = vmatpush1.bf16.msra.mxu0 0
      %229 = vmatprep.subr.bf16.mxu0 0
      %230 = vmatpush1.bf16.msra.mxu0 0
      %231 = vmatprep.subr.bf16.mxu0 0
      %232 = vmatpush1.bf16.msra.mxu0 0
      %233 = vmatprep.subr.bf16.mxu0 0
      %234 = vmatpush1.bf16.msra.mxu0 0
      %235 = vmatprep.subr.bf16.mxu0 0
      %236 = vmatpush1.bf16.msra.mxu0 0
      %237 = vmatprep.subr.bf16.mxu0 0
      %238 = vmatpush1.bf16.msra.mxu0 0
      %239 = vmatprep.subr.bf16.mxu0 0
      %240 = vmatpush1.bf16.msra.mxu0 0
      %241 = vmatprep.subr.bf16.mxu0 0
      %242 = vmatpush1.bf16.msra.mxu0 0
      %243 = vmatprep.subr.bf16.mxu0 0
      %244 = vmatpush1.bf16.msra.mxu0 0
      %245 = vmatprep.mubr.bf16.mxu0 0
      %246 = vmatmul.mubr.bf16.gmra.mrb[0].mxu0 %v211
      %v247 = vpop.f32.mrb[0].mxu0
      %v248 = vadd.f32 %v189, %v247
      %v249 = vpop.f32.mrb[0].mxu0
      %v250 = vpop.f32.mrb[0].mxu0
      %v251 = vadd.f32 %v189, %v250
      %v252 = vpop.f32.mrb[0].mxu0
      %253 = vdwg.mxu0
      %vm254 = vcmask 261120
      %255 = vst.msk [vmem:[%s172] sm:$0xff] %vm254, %v248
      %256 = vst.msk [vmem:[%s172 + $0x8] sm:$0xff] %vm254, %v251
      %s257 = smul.u32 2, %s14
      %p258 = scmp.lt.s32.totalorder %s257, 3
      %s259 = scalar_select %p258, %s257, 3
      %s260 = smul.addr %s259, 8
      %s261 = scalar_lea.vmem %s3, %s260
      // Predicated region
      $region33: #{vit_warp_forward.4} parent=31 // pred_check
        %p262 = pneg %p100
      $region34: #{vit_warp_forward.4} parent=31 // pred_check_branch
        %264 = sbr.rel (%p262) target = $region36
      $region35: #{vit_warp_forward.4} parent=31 // pred_region
        %s265 = smul.u32 2, %s14
      $region36: #{vit_warp_forward.4} parent=31 // pred_fallthru
        _
    $region32: #{vit_warp_forward.4} parent=5 // pred_fallthru
      _
    %p266 = scmp.le.s32.totalorder 2, %s9
    // Predicated region
    $region37: #{vit_warp_forward.4} parent=5 // pred_check
      %p267 = pneg %p266
    $region38: #{vit_warp_forward.4} parent=5 // pred_check_branch
      %269 = sbr.rel (%p267) target = $region40
    $region39: #{vit_warp_forward.4} parent=5 // pred_region
      %s270 = ssub.s32 %s9, 2
      // Predicated region
      $region41: #{vit_warp_forward.4} parent=39 // pred_check
        %p271 = pneg %p106
      $region42: #{vit_warp_forward.4} parent=39 // pred_check_branch
        %273 = sbr.rel (%p271) target = $region44
      $region43: #{vit_warp_forward.4} parent=39 // pred_region
        %s274 = smul.u32 2, %s15
        %p275 = scmp.lt.s32.totalorder %s274, 3
        %s276 = scalar_select %p275, %s274, 3
        %s277 = smul.addr %s276, 8
        %s278 = scalar_lea.vmem %s3, %s277
      $region44: #{vit_warp_forward.4} parent=39 // pred_fallthru
        _
    $region40: #{vit_warp_forward.4} parent=5 // pred_fallthru
      _
  $region6: #{vit_warp_forward.4} parent=0 // loop_footer
    %s13 = sadd.s32 1, %s9
  $region7: #{vit_warp_forward.4} parent=0 // loop_footer_branch
    %8 = sbr.rel target = $region3
  $region8: #{vit_warp_forward.4} parent=0 // loop_exit
    _

// kernel: vit_warp_forward.7
$region0: #{vit_warp_forward.7}
  #allocation0 [shape = 'u32[]', space=smem, size = 0x4, offset = 0x4, fixed_abs, tag = 'smem constant byte address 0x4 - core index']
  #allocation1 [shape = 'u32[144,128]{1,0:T(1,128)}', space=vmem, size = 0x12000, scoped, tag = 'internal scratch']
  %s0 = inlined_call_operand.vmem [shape: f32[2,32], index: 0, kind: input, shape index: {}]
  %s1 = inlined_call_operand.vmem [shape: f32[1,32], index: 1, kind: input, shape index: {}]
  %s2 = inlined_call_operand.vmem [shape: f32[1,32], index: 2, kind: input, shape index: {}]
  %s3 = inlined_call_operand.vmem [shape: bf16[32,128], index: 3, kind: input, shape index: {}]
  %s4 = inlined_call_operand.vmem [shape: f32[1,128], index: 4, kind: input, shape index: {}]
  %s5 = inlined_call_operand.hbm [shape: f32[2,128], index: 5, kind: output, shape index: {}]
  %s6 = sld [smem:[#allocation0]]
  $region30: #{vit_warp_forward.7} parent=0
    _
  %s8 = ssub.s32 1, %s6
  %s9 = scalar_select 0, %s8, %s6
  $region1: #{vit_warp_forward.7} parent=0
    #allocation2 [shape = 'u8[1024]{0}', space=vmem, size = 0x400, scoped, tag = 'output window, operand 0, single buffered']
    #allocation3 [shape = 's32[1]{0}', space=sflag, size = 0x4, scoped, tag = 'scoped memory for vit_warp_forward.7']
    %10 = vsyncpa [#allocation3], 0
    // Predicated region
    $region2: #{vit_warp_forward.7} parent=1 // pred_check
      _
    $region3: #{vit_warp_forward.7} parent=1 // pred_check_branch
      %12 = sbr.rel (0) target = $region5
    $region4: #{vit_warp_forward.7} parent=1 // pred_region
      _
    $region5: #{vit_warp_forward.7} parent=1 // pred_fallthru
      _
    // Predicated region
    $region6: #{vit_warp_forward.7} parent=1 // pred_check
      _
    $region7: #{vit_warp_forward.7} parent=1 // pred_check_branch
      %14 = sbr.rel (0) target = $region9
    $region8: #{vit_warp_forward.7} parent=1 // pred_region
      _
    $region9: #{vit_warp_forward.7} parent=1 // pred_fallthru
      _
    // Predicated region
    $region10: #{vit_warp_forward.7} parent=1 // pred_check
      _
    $region11: #{vit_warp_forward.7} parent=1 // pred_check_branch
      %16 = sbr.rel (0) target = $region13
    $region12: #{vit_warp_forward.7} parent=1 // pred_region
      _
    $region13: #{vit_warp_forward.7} parent=1 // pred_fallthru
      _
    // Predicated region
    $region14: #{vit_warp_forward.7} parent=1 // pred_check
      _
    $region15: #{vit_warp_forward.7} parent=1 // pred_check_branch
      %18 = sbr.rel (0) target = $region17
    $region16: #{vit_warp_forward.7} parent=1 // pred_region
      _
    $region17: #{vit_warp_forward.7} parent=1 // pred_fallthru
      _
    // Predicated region
    $region18: #{vit_warp_forward.7} parent=1 // pred_check
      _
    $region19: #{vit_warp_forward.7} parent=1 // pred_check_branch
      %20 = sbr.rel (0) target = $region21
    $region20: #{vit_warp_forward.7} parent=1 // pred_region
      _
    $region21: #{vit_warp_forward.7} parent=1 // pred_fallthru
      _
    %v22 = vld [vmem:[%s0] sm:$0x3]
    %v23 = vld [vmem:[%s1] sm:$0x1]
    %v24 = vld [vmem:[%s2] sm:$0x1]
    %vm25 = vcmask 254976
    %v26 = vsel %vm25, %v22, 0.0
    %27 = vadd.xlane.f32.xlu0 %v26
    %v28 = vpop.xlane.xlu0 %27
    %v29 = vrcp.pop 32.0
    %v30 = vmul.f32 %v28, %v29
    %v31 = vsub.f32 %v22, %v30
    %v32 = vmul.f32 %v31, %v31
    %v33 = vsel %vm25, %v32, 0.0
    %34 = vadd.xlane.f32.xlu0 %v33
    %v35 = vpop.xlane.xlu0 %34
    %v36 = vmul.f32 %v35, %v29
    %v37 = vadd.f32 %v36, 1e-06
    %v38 = vrsqrt.pop %v37
    %v39 = vmul.f32 %v31, %v38
    %v41 = vlaneseq
    %v42 = vshrl.u32 %v41, 7
    %v43 = vsub.s32 0, %v42
    %v44 = vrot.slane %v23, %v43
    %v46 = vmul.f32 %v39, %v44
    %v48 = vlaneseq
    %v49 = vshrl.u32 %v48, 7
    %v50 = vsub.s32 0, %v49
    %v51 = vrot.slane %v24, %v50
    %v53 = vadd.f32 %v46, %v51
    %v54 = vpack.c.bf16 %v53, %v53
    %v55 = vld [vmem:[%s3] sm:$0xf]
    %v56 = vld [vmem:[%s3 + $0x4] sm:$0xf]
    %v57 = vld [vmem:[%s3 + $0x8] sm:$0xf]
    %v58 = vld [vmem:[%s3 + $0xc] sm:$0xf]
    %v59 = vld [vmem:[%s4] sm:$0x1]
    %v61 = vlaneseq
    %v62 = vshrl.u32 %v61, 7
    %v63 = vsub.s32 0, %v62
    %v64 = vrot.slane %v59, %v63
    %v70 = vunpack.c.l.b16 %v55
    %v71 = vunpack.c.l.b16 %v56
    %v72 = vunpack.c.l.b16 %v57
    %v73 = vunpack.c.l.b16 %v58
    %v74 = vpack.c.b16 %v71, %v70
    %v75 = vpack.c.b16 %v73, %v72
    %vm78 = vcmask 261120
    %v80 = vsel %vm78, %v54, 0
    %82 = vmatprep.subr.bf16.mxu0 0
    %83 = vmatpush1.bf16.msra.mxu0 %v74
    %84 = vmatprep.subr.bf16.mxu0 0
    %85 = vmatpush1.bf16.msra.mxu0 %v75
    %86 = vmatprep.subr.bf16.mxu0 0
    %87 = vmatpush1.bf16.msra.mxu0 0
    %88 = vmatprep.subr.bf16.mxu0 0
    %89 = vmatpush1.bf16.msra.mxu0 0
    %90 = vmatprep.subr.bf16.mxu0 0
    %91 = vmatpush1.bf16.msra.mxu0 0
    %92 = vmatprep.subr.bf16.mxu0 0
    %93 = vmatpush1.bf16.msra.mxu0 0
    %94 = vmatprep.subr.bf16.mxu0 0
    %95 = vmatpush1.bf16.msra.mxu0 0
    %96 = vmatprep.subr.bf16.mxu0 0
    %97 = vmatpush1.bf16.msra.mxu0 0
    %98 = vmatprep.subr.bf16.mxu0 0
    %99 = vmatpush1.bf16.msra.mxu0 0
    %100 = vmatprep.subr.bf16.mxu0 0
    %101 = vmatpush1.bf16.msra.mxu0 0
    %102 = vmatprep.subr.bf16.mxu0 0
    %103 = vmatpush1.bf16.msra.mxu0 0
    %104 = vmatprep.subr.bf16.mxu0 0
    %105 = vmatpush1.bf16.msra.mxu0 0
    %106 = vmatprep.subr.bf16.mxu0 0
    %107 = vmatpush1.bf16.msra.mxu0 0
    %108 = vmatprep.subr.bf16.mxu0 0
    %109 = vmatpush1.bf16.msra.mxu0 0
    %110 = vmatprep.subr.bf16.mxu0 0
    %111 = vmatpush1.bf16.msra.mxu0 0
    %112 = vmatprep.subr.bf16.mxu0 0
    %113 = vmatpush1.bf16.msra.mxu0 0
    %114 = vmatprep.mubr.bf16.mxu0 0
    %115 = vmatmul.mubr.bf16.gmra.mrb[0].mxu0 %v80
    %v116 = vpop.f32.mrb[0].mxu0
    %v117 = vadd.f32 %v64, %v116
    %v118 = vpop.f32.mrb[0].mxu0
    %v119 = vpop.f32.mrb[0].mxu0
    %v120 = vpop.f32.mrb[0].mxu0
    %121 = vdwg.mxu0
    %122 = vst [vmem:[#allocation2] sm:$0x3] %v117
    // Predicated region
    $region22: #{vit_warp_forward.7} parent=1 // pred_check
      _
    $region23: #{vit_warp_forward.7} parent=1 // pred_check_branch
      %124 = sbr.rel (0) target = $region25
    $region24: #{vit_warp_forward.7} parent=1 // pred_region
      %s126 = ssub.s32 32, 32
      %127 = vsyncadd [#allocation3], %s126
      %s129 = sshll.u32 [#allocation2], 4
      %s130 = int_to_ptr.vmem [resolvable:$true] %s129
      %132 = dma.vmem_to_hbm [thread:$0]  %s130, 32, %s5, [#allocation3]
    $region25: #{vit_warp_forward.7} parent=1 // pred_fallthru
      _
    // Predicated region
    $region26: #{vit_warp_forward.7} parent=1 // pred_check
      _
    $region27: #{vit_warp_forward.7} parent=1 // pred_check_branch
      %134 = sbr.rel (0) target = $region29
    $region28: #{vit_warp_forward.7} parent=1 // pred_region
      %135 = dma.done [#allocation3], 32
    $region29: #{vit_warp_forward.7} parent=1 // pred_fallthru
      _
    %136 = vsyncpa [#allocation3], 1

// kernel: vit_warp_forward.5
$region0: #{vit_warp_forward.5}
  #allocation0 [shape = 'u32[]', space=smem, size = 0x4, offset = 0x4, fixed_abs, tag = 'smem constant byte address 0x4 - core index']
  #allocation1 [shape = 'u32[144,128]{1,0:T(1,128)}', space=vmem, size = 0x12000, scoped, tag = 'internal scratch']
  #allocation2 [shape = 'bf16[1,17,32]{2,1,0:T(8,128)(2,1)}', space=vmem, size = 0x1800, scoped, tag = 'scratch operand']
  %s0 = inlined_call_operand.vmem [shape: f32[2,17,32], index: 0, kind: input, shape index: {}]
  %s1 = inlined_call_operand.vmem [shape: f32[1,32], index: 1, kind: input, shape index: {}]
  %s2 = inlined_call_operand.vmem [shape: f32[1,32], index: 2, kind: input, shape index: {}]
  %s3 = inlined_call_operand.vmem [shape: bf16[32,96], index: 3, kind: input, shape index: {}]
  %s4 = inlined_call_operand.vmem [shape: f32[1,96], index: 4, kind: input, shape index: {}]
  %s5 = inlined_call_operand.vmem [shape: bf16[32,32], index: 5, kind: input, shape index: {}]
  %s6 = inlined_call_operand.vmem [shape: f32[1,32], index: 6, kind: input, shape index: {}]
  %s7 = inlined_call_operand.vmem [shape: f32[1,32], index: 7, kind: input, shape index: {}]
  %s8 = inlined_call_operand.vmem [shape: f32[1,32], index: 8, kind: input, shape index: {}]
  %s9 = inlined_call_operand.vmem [shape: bf16[32,128], index: 9, kind: input, shape index: {}]
  %s10 = inlined_call_operand.vmem [shape: f32[1,128], index: 10, kind: input, shape index: {}]
  %s11 = inlined_call_operand.vmem [shape: bf16[128,32], index: 11, kind: input, shape index: {}]
  %s12 = inlined_call_operand.vmem [shape: f32[1,32], index: 12, kind: input, shape index: {}]
  %s13 = inlined_call_operand.vmem [shape: f32[2,17,32], index: 13, kind: output, shape index: {}]
  %s14 = sld [smem:[#allocation0]]
  $region85: #{vit_warp_forward.5} parent=0
    _
  %s16 = ssub.s32 1, %s14
  %s17 = scalar_select 0, %s16, %s14
  loop: start=0, step=1, limit=4
  $region2: #{vit_warp_forward.5} parent=0 // loop_pre_header
    _
  $region3: #{vit_warp_forward.5} parent=0 // loop_header
    %s19 = sphi 0, %s23
    %p20 = scmp.ge.s32.totalorder %s19, 4
    %s29 = sphi 0, %s31
    %s32 = sphi 0, %s29
    %s33 = sphi 0, %s32
    %s49 = sphi 0, %s33
    %s53 = sphi 0, %s53
    %s55 = sphi 0, %s53
    %s56 = sphi 0, %s55
    %s70 = sphi 0, %s56
    %s74 = sphi 0, %s74
    %s76 = sphi 0, %s74
    %s77 = sphi 0, %s76
    %s91 = sphi 0, %s77
    %s95 = sphi 0, %s95
    %s97 = sphi 0, %s95
    %s98 = sphi 0, %s97
    %s112 = sphi 0, %s98
    %s116 = sphi 0, %s116
    %s118 = sphi 0, %s116
    %s119 = sphi 0, %s118
    %s133 = sphi 0, %s119
    %s137 = sphi 0, %s137
    %s139 = sphi 0, %s137
    %s140 = sphi 0, %s139
    %s154 = sphi 0, %s140
    %s158 = sphi 0, %s158
    %s160 = sphi 0, %s158
    %s161 = sphi 0, %s160
    %s175 = sphi 0, %s161
    %s179 = sphi 0, %s179
    %s181 = sphi 0, %s179
    %s182 = sphi 0, %s181
    %s196 = sphi 0, %s182
    %s200 = sphi 0, %s200
    %s202 = sphi 0, %s200
    %s203 = sphi 0, %s202
    %s217 = sphi 0, %s203
    %s221 = sphi 0, %s221
    %s223 = sphi 0, %s221
    %s224 = sphi 0, %s223
    %s238 = sphi 0, %s224
    %s242 = sphi 0, %s242
    %s244 = sphi 0, %s242
    %s245 = sphi 0, %s244
    %s259 = sphi 0, %s245
    %s263 = sphi 0, %s263
    %s265 = sphi 0, %s263
    %s266 = sphi 0, %s265
    %s280 = sphi 0, %s266
    %s284 = sphi 0, %s284
    %s286 = sphi 0, %s284
    %s287 = sphi 0, %s286
    %s301 = sphi 0, %s287
    %s307 = sphi 0, %s309
    %s310 = sphi 0, %s307
    %s311 = sphi 0, %s310
    %s327 = sphi 0, %s311
  $region4: #{vit_warp_forward.5} parent=0 // loop_header_branch
    %22 = sbr.rel (%p20) target = $region8
  $region5: #{vit_warp_forward.5} parent=0 // loop_body
    %s24 = ssub.s32 %s19, 1
    %s25 = ssub.s32 %s19, 2
    %s26 = sadd.s32 %s19, 1
    %s27 = ssub.s32 %s19, %s26
    %p28 = scmp.eq.s32.totalorder %s27, 0
    %s30 = sadd.s32 %s29, 1
    %s31 = scalar_select %p28, %s29, %s30
    %p34 = pneg %p28
    %p35 = scmp.eq.s32.totalorder %s19, 1
    %p36 = por %p34, %p35
    %p37 = scmp.ne.s32.totalorder %s29, %s32
    %p38 = scmp.eq.s32.totalorder %s19, 0
    %p39 = por %p37, %p38
    %p40 = scmp.ne.s32.totalorder %s29, %s32
    %p41 = scmp.eq.s32.totalorder %s24, 1
    %p42 = por %p40, %p41
    %p43 = scmp.ne.s32.totalorder %s32, %s33
    %p44 = scmp.eq.s32.totalorder %s24, 0
    %p45 = por %p43, %p44
    %p46 = scmp.ne.s32.totalorder %s32, %s33
    %p47 = scmp.eq.s32.totalorder %s25, 1
    %p48 = por %p46, %p47
    %p50 = scmp.ne.s32.totalorder %s33, %s49
    %p51 = scmp.eq.s32.totalorder %s25, 0
    %p52 = por %p50, %p51
    %s54 = sadd.s32 %s53, 1
    %p57 = scmp.eq.s32.totalorder %s19, 1
    %p58 = scmp.ne.s32.totalorder %s53, %s55
    %p59 = scmp.eq.s32.totalorder %s19, 0
    %p60 = por %p58, %p59
    %p61 = scmp.ne.s32.totalorder %s53, %s55
    %p62 = scmp.eq.s32.totalorder %s24, 1
    %p63 = por %p61, %p62
    %p64 = scmp.ne.s32.totalorder %s55, %s56
    %p65 = scmp.eq.s32.totalorder %s24, 0
    %p66 = por %p64, %p65
    %p67 = scmp.ne.s32.totalorder %s55, %s56
    %p68 = scmp.eq.s32.totalorder %s25, 1
    %p69 = por %p67, %p68
    %p71 = scmp.ne.s32.totalorder %s56, %s70
    %p72 = scmp.eq.s32.totalorder %s25, 0
    %p73 = por %p71, %p72
    %s75 = sadd.s32 %s74, 1
    %p78 = scmp.eq.s32.totalorder %s19, 1
    %p79 = scmp.ne.s32.totalorder %s74, %s76
    %p80 = scmp.eq.s32.totalorder %s19, 0
    %p81 = por %p79, %p80
    %p82 = scmp.ne.s32.totalorder %s74, %s76
    %p83 = scmp.eq.s32.totalorder %s24, 1
    %p84 = por %p82, %p83
    %p85 = scmp.ne.s32.totalorder %s76, %s77
    %p86 = scmp.eq.s32.totalorder %s24, 0
    %p87 = por %p85, %p86
    %p88 = scmp.ne.s32.totalorder %s76, %s77
    %p89 = scmp.eq.s32.totalorder %s25, 1
    %p90 = por %p88, %p89
    %p92 = scmp.ne.s32.totalorder %s77, %s91
    %p93 = scmp.eq.s32.totalorder %s25, 0
    %p94 = por %p92, %p93
    %s96 = sadd.s32 %s95, 1
    %p99 = scmp.eq.s32.totalorder %s19, 1
    %p100 = scmp.ne.s32.totalorder %s95, %s97
    %p101 = scmp.eq.s32.totalorder %s19, 0
    %p102 = por %p100, %p101
    %p103 = scmp.ne.s32.totalorder %s95, %s97
    %p104 = scmp.eq.s32.totalorder %s24, 1
    %p105 = por %p103, %p104
    %p106 = scmp.ne.s32.totalorder %s97, %s98
    %p107 = scmp.eq.s32.totalorder %s24, 0
    %p108 = por %p106, %p107
    %p109 = scmp.ne.s32.totalorder %s97, %s98
    %p110 = scmp.eq.s32.totalorder %s25, 1
    %p111 = por %p109, %p110
    %p113 = scmp.ne.s32.totalorder %s98, %s112
    %p114 = scmp.eq.s32.totalorder %s25, 0
    %p115 = por %p113, %p114
    %s117 = sadd.s32 %s116, 1
    %p120 = scmp.eq.s32.totalorder %s19, 1
    %p121 = scmp.ne.s32.totalorder %s116, %s118
    %p122 = scmp.eq.s32.totalorder %s19, 0
    %p123 = por %p121, %p122
    %p124 = scmp.ne.s32.totalorder %s116, %s118
    %p125 = scmp.eq.s32.totalorder %s24, 1
    %p126 = por %p124, %p125
    %p127 = scmp.ne.s32.totalorder %s118, %s119
    %p128 = scmp.eq.s32.totalorder %s24, 0
    %p129 = por %p127, %p128
    %p130 = scmp.ne.s32.totalorder %s118, %s119
    %p131 = scmp.eq.s32.totalorder %s25, 1
    %p132 = por %p130, %p131
    %p134 = scmp.ne.s32.totalorder %s119, %s133
    %p135 = scmp.eq.s32.totalorder %s25, 0
    %p136 = por %p134, %p135
    %s138 = sadd.s32 %s137, 1
    %p141 = scmp.eq.s32.totalorder %s19, 1
    %p142 = scmp.ne.s32.totalorder %s137, %s139
    %p143 = scmp.eq.s32.totalorder %s19, 0
    %p144 = por %p142, %p143
    %p145 = scmp.ne.s32.totalorder %s137, %s139
    %p146 = scmp.eq.s32.totalorder %s24, 1
    %p147 = por %p145, %p146
    %p148 = scmp.ne.s32.totalorder %s139, %s140
    %p149 = scmp.eq.s32.totalorder %s24, 0
    %p150 = por %p148, %p149
    %p151 = scmp.ne.s32.totalorder %s139, %s140
    %p152 = scmp.eq.s32.totalorder %s25, 1
    %p153 = por %p151, %p152
    %p155 = scmp.ne.s32.totalorder %s140, %s154
    %p156 = scmp.eq.s32.totalorder %s25, 0
    %p157 = por %p155, %p156
    %s159 = sadd.s32 %s158, 1
    %p162 = scmp.eq.s32.totalorder %s19, 1
    %p163 = scmp.ne.s32.totalorder %s158, %s160
    %p164 = scmp.eq.s32.totalorder %s19, 0
    %p165 = por %p163, %p164
    %p166 = scmp.ne.s32.totalorder %s158, %s160
    %p167 = scmp.eq.s32.totalorder %s24, 1
    %p168 = por %p166, %p167
    %p169 = scmp.ne.s32.totalorder %s160, %s161
    %p170 = scmp.eq.s32.totalorder %s24, 0
    %p171 = por %p169, %p170
    %p172 = scmp.ne.s32.totalorder %s160, %s161
    %p173 = scmp.eq.s32.totalorder %s25, 1
    %p174 = por %p172, %p173
    %p176 = scmp.ne.s32.totalorder %s161, %s175
    %p177 = scmp.eq.s32.totalorder %s25, 0
    %p178 = por %p176, %p177
    %s180 = sadd.s32 %s179, 1
    %p183 = scmp.eq.s32.totalorder %s19, 1
    %p184 = scmp.ne.s32.totalorder %s179, %s181
    %p185 = scmp.eq.s32.totalorder %s19, 0
    %p186 = por %p184, %p185
    %p187 = scmp.ne.s32.totalorder %s179, %s181
    %p188 = scmp.eq.s32.totalorder %s24, 1
    %p189 = por %p187, %p188
    %p190 = scmp.ne.s32.totalorder %s181, %s182
    %p191 = scmp.eq.s32.totalorder %s24, 0
    %p192 = por %p190, %p191
    %p193 = scmp.ne.s32.totalorder %s181, %s182
    %p194 = scmp.eq.s32.totalorder %s25, 1
    %p195 = por %p193, %p194
    %p197 = scmp.ne.s32.totalorder %s182, %s196
    %p198 = scmp.eq.s32.totalorder %s25, 0
    %p199 = por %p197, %p198
    %s201 = sadd.s32 %s200, 1
    %p204 = scmp.eq.s32.totalorder %s19, 1
    %p205 = scmp.ne.s32.totalorder %s200, %s202
    %p206 = scmp.eq.s32.totalorder %s19, 0
    %p207 = por %p205, %p206
    %p208 = scmp.ne.s32.totalorder %s200, %s202
    %p209 = scmp.eq.s32.totalorder %s24, 1
    %p210 = por %p208, %p209
    %p211 = scmp.ne.s32.totalorder %s202, %s203
    %p212 = scmp.eq.s32.totalorder %s24, 0
    %p213 = por %p211, %p212
    %p214 = scmp.ne.s32.totalorder %s202, %s203
    %p215 = scmp.eq.s32.totalorder %s25, 1
    %p216 = por %p214, %p215
    %p218 = scmp.ne.s32.totalorder %s203, %s217
    %p219 = scmp.eq.s32.totalorder %s25, 0
    %p220 = por %p218, %p219
    %s222 = sadd.s32 %s221, 1
    %p225 = scmp.eq.s32.totalorder %s19, 1
    %p226 = scmp.ne.s32.totalorder %s221, %s223
    %p227 = scmp.eq.s32.totalorder %s19, 0
    %p228 = por %p226, %p227
    %p229 = scmp.ne.s32.totalorder %s221, %s223
    %p230 = scmp.eq.s32.totalorder %s24, 1
    %p231 = por %p229, %p230
    %p232 = scmp.ne.s32.totalorder %s223, %s224
    %p233 = scmp.eq.s32.totalorder %s24, 0
    %p234 = por %p232, %p233
    %p235 = scmp.ne.s32.totalorder %s223, %s224
    %p236 = scmp.eq.s32.totalorder %s25, 1
    %p237 = por %p235, %p236
    %p239 = scmp.ne.s32.totalorder %s224, %s238
    %p240 = scmp.eq.s32.totalorder %s25, 0
    %p241 = por %p239, %p240
    %s243 = sadd.s32 %s242, 1
    %p246 = scmp.eq.s32.totalorder %s19, 1
    %p247 = scmp.ne.s32.totalorder %s242, %s244
    %p248 = scmp.eq.s32.totalorder %s19, 0
    %p249 = por %p247, %p248
    %p250 = scmp.ne.s32.totalorder %s242, %s244
    %p251 = scmp.eq.s32.totalorder %s24, 1
    %p252 = por %p250, %p251
    %p253 = scmp.ne.s32.totalorder %s244, %s245
    %p254 = scmp.eq.s32.totalorder %s24, 0
    %p255 = por %p253, %p254
    %p256 = scmp.ne.s32.totalorder %s244, %s245
    %p257 = scmp.eq.s32.totalorder %s25, 1
    %p258 = por %p256, %p257
    %p260 = scmp.ne.s32.totalorder %s245, %s259
    %p261 = scmp.eq.s32.totalorder %s25, 0
    %p262 = por %p260, %p261
    %s264 = sadd.s32 %s263, 1
    %p267 = scmp.eq.s32.totalorder %s19, 1
    %p268 = scmp.ne.s32.totalorder %s263, %s265
    %p269 = scmp.eq.s32.totalorder %s19, 0
    %p270 = por %p268, %p269
    %p271 = scmp.ne.s32.totalorder %s263, %s265
    %p272 = scmp.eq.s32.totalorder %s24, 1
    %p273 = por %p271, %p272
    %p274 = scmp.ne.s32.totalorder %s265, %s266
    %p275 = scmp.eq.s32.totalorder %s24, 0
    %p276 = por %p274, %p275
    %p277 = scmp.ne.s32.totalorder %s265, %s266
    %p278 = scmp.eq.s32.totalorder %s25, 1
    %p279 = por %p277, %p278
    %p281 = scmp.ne.s32.totalorder %s266, %s280
    %p282 = scmp.eq.s32.totalorder %s25, 0
    %p283 = por %p281, %p282
    %s285 = sadd.s32 %s284, 1
    %p288 = scmp.eq.s32.totalorder %s19, 1
    %p289 = scmp.ne.s32.totalorder %s284, %s286
    %p290 = scmp.eq.s32.totalorder %s19, 0
    %p291 = por %p289, %p290
    %p292 = scmp.ne.s32.totalorder %s284, %s286
    %p293 = scmp.eq.s32.totalorder %s24, 1
    %p294 = por %p292, %p293
    %p295 = scmp.ne.s32.totalorder %s286, %s287
    %p296 = scmp.eq.s32.totalorder %s24, 0
    %p297 = por %p295, %p296
    %p298 = scmp.ne.s32.totalorder %s286, %s287
    %p299 = scmp.eq.s32.totalorder %s25, 1
    %p300 = por %p298, %p299
    %p302 = scmp.ne.s32.totalorder %s287, %s301
    %p303 = scmp.eq.s32.totalorder %s25, 0
    %p304 = por %p302, %p303
    %s305 = ssub.s32 %s19, %s26
    %p306 = scmp.eq.s32.totalorder %s305, 0
    %s308 = sadd.s32 %s307, 1
    %s309 = scalar_select %p306, %s307, %s308
    %p312 = pneg %p306
    %p313 = scmp.eq.s32.totalorder %s19, 1
    %p314 = por %p312, %p313
    %p315 = scmp.ne.s32.totalorder %s307, %s310
    %p316 = scmp.eq.s32.totalorder %s19, 0
    %p317 = por %p315, %p316
    %p318 = scmp.ne.s32.totalorder %s307, %s310
    %p319 = scmp.eq.s32.totalorder %s24, 1
    %p320 = por %p318, %p319
    %p321 = scmp.ne.s32.totalorder %s310, %s311
    %p322 = scmp.eq.s32.totalorder %s24, 0
    %p323 = por %p321, %p322
    %p324 = scmp.ne.s32.totalorder %s310, %s311
    %p325 = scmp.eq.s32.totalorder %s25, 1
    %p326 = por %p324, %p325
    %p328 = scmp.ne.s32.totalorder %s311, %s327
    %p329 = scmp.eq.s32.totalorder %s25, 0
    %p330 = por %p328, %p329
    %p331 = scmp.le.s32.totalorder 1, %s19
    %p332 = scmp.lt.s32.totalorder %s19, 3
    %p333 = pnand %p331, %p332
    %p334 = pneg %p333
    // Predicated region
    $region9: #{vit_warp_forward.5} parent=5 // pred_check
      _
    $region10: #{vit_warp_forward.5} parent=5 // pred_check_branch
      %336 = sbr.rel (%p333) target = $region12
    $region11: #{vit_warp_forward.5} parent=5 // pred_region
      %s337 = ssub.s32 %s19, 1
      // Predicated region
      $region13: #{vit_warp_forward.5} parent=11 // pred_check
        %p338 = pneg %p66
      $region14: #{vit_warp_forward.5} parent=11 // pred_check_branch
        %340 = sbr.rel (%p338) target = $region16
      $region15: #{vit_warp_forward.5} parent=11 // pred_region
        _
      $region16: #{vit_warp_forward.5} parent=11 // pred_fallthru
        _
      // Predicated region
      $region17: #{vit_warp_forward.5} parent=11 // pred_check
        %p341 = pneg %p87
      $region18: #{vit_warp_forward.5} parent=11 // pred_check_branch
        %343 = sbr.rel (%p341) target = $region20
      $region19: #{vit_warp_forward.5} parent=11 // pred_region
        _
      $region20: #{vit_warp_forward.5} parent=11 // pred_fallthru
        _
      // Predicated region
      $region21: #{vit_warp_forward.5} parent=11 // pred_check
        %p344 = pneg %p108
      $region22: #{vit_warp_forward.5} parent=11 // pred_check_branch
        %346 = sbr.rel (%p344) target = $region24
      $region23: #{vit_warp_forward.5} parent=11 // pred_region
        _
      $region24: #{vit_warp_forward.5} parent=11 // pred_fallthru
        _
      // Predicated region
      $region25: #{vit_warp_forward.5} parent=11 // pred_check
        %p347 = pneg %p129
      $region26: #{vit_warp_forward.5} parent=11 // pred_check_branch
        %349 = sbr.rel (%p347) target = $region28
      $region27: #{vit_warp_forward.5} parent=11 // pred_region
        _
      $region28: #{vit_warp_forward.5} parent=11 // pred_fallthru
        _
      // Predicated region
      $region29: #{vit_warp_forward.5} parent=11 // pred_check
        %p350 = pneg %p150
      $region30: #{vit_warp_forward.5} parent=11 // pred_check_branch
        %352 = sbr.rel (%p350) target = $region32
      $region31: #{vit_warp_forward.5} parent=11 // pred_region
        _
      $region32: #{vit_warp_forward.5} parent=11 // pred_fallthru
        _
      // Predicated region
      $region33: #{vit_warp_forward.5} parent=11 // pred_check
        %p353 = pneg %p171
      $region34: #{vit_warp_forward.5} parent=11 // pred_check_branch
        %355 = sbr.rel (%p353) target = $region36
      $region35: #{vit_warp_forward.5} parent=11 // pred_region
        _
      $region36: #{vit_warp_forward.5} parent=11 // pred_fallthru
        _
      // Predicated region
      $region37: #{vit_warp_forward.5} parent=11 // pred_check
        %p356 = pneg %p192
      $region38: #{vit_warp_forward.5} parent=11 // pred_check_branch
        %358 = sbr.rel (%p356) target = $region40
      $region39: #{vit_warp_forward.5} parent=11 // pred_region
        _
      $region40: #{vit_warp_forward.5} parent=11 // pred_fallthru
        _
      // Predicated region
      $region41: #{vit_warp_forward.5} parent=11 // pred_check
        %p359 = pneg %p213
      $region42: #{vit_warp_forward.5} parent=11 // pred_check_branch
        %361 = sbr.rel (%p359) target = $region44
      $region43: #{vit_warp_forward.5} parent=11 // pred_region
        _
      $region44: #{vit_warp_forward.5} parent=11 // pred_fallthru
        _
      // Predicated region
      $region45: #{vit_warp_forward.5} parent=11 // pred_check
        %p362 = pneg %p234
      $region46: #{vit_warp_forward.5} parent=11 // pred_check_branch
        %364 = sbr.rel (%p362) target = $region48
      $region47: #{vit_warp_forward.5} parent=11 // pred_region
        _
      $region48: #{vit_warp_forward.5} parent=11 // pred_fallthru
        _
      // Predicated region
      $region49: #{vit_warp_forward.5} parent=11 // pred_check
        %p365 = pneg %p255
      $region50: #{vit_warp_forward.5} parent=11 // pred_check_branch
        %367 = sbr.rel (%p365) target = $region52
      $region51: #{vit_warp_forward.5} parent=11 // pred_region
        _
      $region52: #{vit_warp_forward.5} parent=11 // pred_fallthru
        _
      // Predicated region
      $region53: #{vit_warp_forward.5} parent=11 // pred_check
        %p368 = pneg %p276
      $region54: #{vit_warp_forward.5} parent=11 // pred_check_branch
        %370 = sbr.rel (%p368) target = $region56
      $region55: #{vit_warp_forward.5} parent=11 // pred_region
        _
      $region56: #{vit_warp_forward.5} parent=11 // pred_fallthru
        _
      // Predicated region
      $region57: #{vit_warp_forward.5} parent=11 // pred_check
        %p371 = pneg %p297
      $region58: #{vit_warp_forward.5} parent=11 // pred_check_branch
        %373 = sbr.rel (%p371) target = $region60
      $region59: #{vit_warp_forward.5} parent=11 // pred_region
        _
      $region60: #{vit_warp_forward.5} parent=11 // pred_fallthru
        _
    $region12: #{vit_warp_forward.5} parent=5 // pred_fallthru
      _
    %p374 = scmp.lt.s32.totalorder %s19, 2
    // Predicated region
    $region61: #{vit_warp_forward.5} parent=5 // pred_check
      %p375 = pneg %p374
    $region62: #{vit_warp_forward.5} parent=5 // pred_check_branch
      %377 = sbr.rel (%p375) target = $region64
    $region63: #{vit_warp_forward.5} parent=5 // pred_region
      // Predicated region
      $region65: #{vit_warp_forward.5} parent=63 // pred_check
        %p378 = pneg %p39
      $region66: #{vit_warp_forward.5} parent=63 // pred_check_branch
        %380 = sbr.rel (%p378) target = $region68
      $region67: #{vit_warp_forward.5} parent=63 // pred_region
        %p381 = scmp.lt.s32.totalorder %s19, 1
        %s382 = scalar_select %p381, %s19, 1
        %s383 = smul.addr %s382, 3
        %s384 = smul.addr %s383, 8
        %s385 = scalar_lea.vmem %s0, %s384
      $region68: #{vit_warp_forward.5} parent=63 // pred_fallthru
        _
    $region64: #{vit_warp_forward.5} parent=5 // pred_fallthru
      _
    %p386 = scmp.le.s32.totalorder 1, %s19
    %p387 = scmp.lt.s32.totalorder %s19, 3
    %p388 = pnand %p386, %p387
    %p389 = pneg %p388
    // Predicated region
    $region69: #{vit_warp_forward.5} parent=5 // pred_check
      _
    $region70: #{vit_warp_forward.5} parent=5 // pred_check_branch
      %391 = sbr.rel (%p388) target = $region72
    $region71: #{vit_warp_forward.5} parent=5 // pred_region
      %s392 = ssub.s32 %s19, 1
      %p393 = scmp.lt.s32.totalorder %s24, 1
      %s394 = scalar_select %p393, %s24, 1
      %s395 = smul.addr %s394, 3
      %s396 = smul.addr %s395, 8
      %s397 = scalar_lea.vmem %s0, %s396
      %p398 = pneg %p45
      %p399 = pneg %p42
      %p400 = pneg %p66
      %p401 = pneg %p63
      %p402 = pneg %p87
      %p403 = pneg %p84
      %p404 = pneg %p108
      %p405 = pneg %p105
      %p406 = pneg %p129
      %p407 = pneg %p126
      %p408 = pneg %p150
      %p409 = pneg %p147
      %p410 = pneg %p171
      %p411 = pneg %p168
      %p412 = pneg %p192
      %p413 = pneg %p189
      %p414 = pneg %p213
      %p415 = pneg %p210
      %p416 = pneg %p234
      %p417 = pneg %p231
      %p418 = pneg %p255
      %p419 = pneg %p252
      %p420 = pneg %p276
      %p421 = pneg %p273
      %p422 = pneg %p297
      %p423 = pneg %p294
      %p424 = pneg %p323
      %p425 = pneg %p320
      %p426 = scmp.lt.s32.totalorder %s24, 1
      %s427 = scalar_select %p426, %s24, 1
      %s428 = smul.addr %s427, 3
      %s429 = smul.addr %s428, 8
      %s430 = scalar_lea.vmem %s13, %s429
      %p431 = scmp.lt.s32.totalorder %s24, 1
      %s432 = scalar_select %p431, %s24, 1
      %s433 = smul.addr %s432, 3
      %s434 = smul.addr %s433, 8
      %s435 = scalar_lea.vmem %s0, %s434
      %p436 = scmp.lt.s32.totalorder %s24, 1
      %s437 = scalar_select %p436, %s24, 1
      %s438 = smul.addr %s437, 3
      %s439 = smul.addr %s438, 8
      %s440 = scalar_lea.vmem %s13, %s439
      %v442 = vld [vmem:[%s435] sm:$0xff]
      %v443 = vld [vmem:[%s435 + $0x8] sm:$0xff]
      %v444 = vld [vmem:[%s435 + $0x10] sm:$0x1]
      %v445 = vld [vmem:[%s1] sm:$0x1]
      %v446 = vld [vmem:[%s2] sm:$0x1]
      %vm447 = vcmask 261120
      %v448 = vsel %vm447, %v442, 0.0
      %449 = vadd.xlane.f32.xlu0 %v448
      %v450 = vpop.xlane.xlu0 %449
      %v451 = vsel %vm447, %v443, 0.0
      %452 = vadd.xlane.f32.xlu0 %v451
      %v453 = vpop.xlane.xlu0 %452
      %vm454 = vcmask 253952
      %v455 = vsel %vm454, %v444, 0.0
      %456 = vadd.xlane.f32.xlu0 %v455
      %v457 = vpop.xlane.xlu0 %456
      %v458 = vrcp.pop 32.0
      %v459 = vmul.f32 %v450, %v458
      %v460 = vmul.f32 %v453, %v458
      %v461 = vmul.f32 %v457, %v458
      %v462 = vsub.f32 %v442, %v459
      %v463 = vsub.f32 %v443, %v460
      %v464 = vsub.f32 %v444, %v461
      %v465 = vmul.f32 %v462, %v462
      %v466 = vmul.f32 %v463, %v463
      %v467 = vmul.f32 %v464, %v464
      %v468 = vsel %vm447, %v465, 0.0
      %469 = vadd.xlane.f32.xlu0 %v468
      %v470 = vpop.xlane.xlu0 %469
      %v471 = vsel %vm447, %v466, 0.0
      %472 = vadd.xlane.f32.xlu0 %v471
      %v473 = vpop.xlane.xlu0 %472
      %v474 = vsel %vm454, %v467, 0.0
      %475 = vadd.xlane.f32.xlu0 %v474
      %v476 = vpop.xlane.xlu0 %475
      %v477 = vmul.f32 %v470, %v458
      %v478 = vmul.f32 %v473, %v458
      %v479 = vmul.f32 %v476, %v458
      %v480 = vadd.f32 %v477, 1e-06
      %v481 = vadd.f32 %v478, 1e-06
      %v482 = vadd.f32 %v479, 1e-06
      %v483 = vrsqrt.pop %v480
      %v484 = vrsqrt.pop %v481
      %v485 = vrsqrt.pop %v482
      %v486 = vmul.f32 %v462, %v483
      %v487 = vmul.f32 %v463, %v484
      %v488 = vmul.f32 %v464, %v485
      %v490 = vlaneseq
      %v491 = vshrl.u32 %v490, 7
      %v492 = vsub.s32 0, %v491
      %v493 = vrot.slane %v445, %v492
      %v495 = vmul.f32 %v486, %v493
      %v496 = vmul.f32 %v487, %v493
      %v497 = vmul.f32 %v488, %v493
      %v499 = vlaneseq
      %v500 = vshrl.u32 %v499, 7
      %v501 = vsub.s32 0, %v500
      %v502 = vrot.slane %v446, %v501
      %v504 = vadd.f32 %v495, %v502
      %v505 = vadd.f32 %v496, %v502
      %v506 = vadd.f32 %v497, %v502
      %v507 = vpack.c.bf16 %v505, %v504
      %v508 = vpack.c.bf16 %v506, %v506
      %v509 = vld [vmem:[%s3] sm:$0xf]
      %v510 = vld [vmem:[%s3 + $0x4] sm:$0xf]
      %v511 = vld [vmem:[%s3 + $0x8] sm:$0xf]
      %v512 = vld [vmem:[%s3 + $0xc] sm:$0xf]
      %v513 = vld [vmem:[%s4] sm:$0x1]
      %v515 = vlaneseq
      %v516 = vshrl.u32 %v515, 7
      %v517 = vsub.s32 0, %v516
      %v518 = vrot.slane %v513, %v517
      %v524 = vunpack.c.l.b16 %v509
      %v525 = vunpack.c.l.b16 %v510
      %v526 = vunpack.c.l.b16 %v511
      %v527 = vunpack.c.l.b16 %v512
      %v528 = vpack.c.b16 %v525, %v524
      %v529 = vpack.c.b16 %v527, %v526
      %v533 = vsel %vm447, %v507, 0
      %v536 = vsel %vm447, %v508, 0
      %538 = vmatprep.subr.bf16.mxu0 0
      %539 = vmatpush1.bf16.msra.mxu0 %v528
      %540 = vmatprep.subr.bf16.mxu0 0
      %541 = vmatpush1.bf16.msra.mxu0 %v529
      %542 = vmatprep.subr.bf16.mxu0 0
      %543 = vmatpush1.bf16.msra.mxu0 0
      %544 = vmatprep.subr.bf16.mxu0 0
      %545 = vmatpush1.bf16.msra.mxu0 0
      %546 = vmatprep.subr.bf16.mxu0 0
      %547 = vmatpush1.bf16.msra.mxu0 0
      %548 = vmatprep.subr.bf16.mxu0 0
      %549 = vmatpush1.bf16.msra.mxu0 0
      %550 = vmatprep.subr.bf16.mxu0 0
      %551 = vmatpush1.bf16.msra.mxu0 0
      %552 = vmatprep.subr.bf16.mxu0 0
      %553 = vmatpush1.bf16.msra.mxu0 0
      %554 = vmatprep.subr.bf16.mxu0 0
      %555 = vmatpush1.bf16.msra.mxu0 0
      %556 = vmatprep.subr.bf16.mxu0 0
      %557 = vmatpush1.bf16.msra.mxu0 0
      %558 = vmatprep.subr.bf16.mxu0 0
      %559 = vmatpush1.bf16.msra.mxu0 0
      %560 = vmatprep.subr.bf16.mxu0 0
      %561 = vmatpush1.bf16.msra.mxu0 0
      %562 = vmatprep.subr.bf16.mxu0 0
      %563 = vmatpush1.bf16.msra.mxu0 0
      %564 = vmatprep.subr.bf16.mxu0 0
      %565 = vmatpush1.bf16.msra.mxu0 0
      %566 = vmatprep.subr.bf16.mxu0 0
      %567 = vmatpush1.bf16.msra.mxu0 0
      %568 = vmatprep.subr.bf16.mxu0 0
      %569 = vmatpush1.bf16.msra.mxu0 0
      %570 = vmatprep.mubr.bf16.mxu0 0
      %571 = vmatmul.mubr.bf16.gmra.mrb[0].mxu0 %v533
      %v572 = vpop.f32.mrb[0].mxu0
      %v573 = vadd.f32 %v518, %v572
      %v574 = vpop.f32.mrb[0].mxu0
      %v575 = vpop.f32.mrb[0].mxu0
      %v576 = vadd.f32 %v518, %v575
      %v577 = vpop.f32.mrb[0].mxu0
      %578 = vmatprep.mubr.bf16.mxu0 0
      %579 = vmatmul.mubr.bf16.gmra.mrb[0].mxu0 %v536
      %v580 = vpop.f32.mrb[0].mxu0
      %v581 = vadd.f32 %v518, %v580
      %v582 = vpop.f32.mrb[0].mxu0
      %v583 = vpop.f32.mrb[0].mxu0
      %v584 = vpop.f32.mrb[0].mxu0
      %585 = vdwg.mxu0
      %v586 = vmul.f32 %v573, 0.25
      %v587 = vmul.f32 %v576, 0.25
      %v588 = vmul.f32 %v581, 0.25
      %v589 = vpack.c.bf16 %v587, %v586
      %v590 = vpack.c.bf16 %v588, %v588
      %v591 = vpack.c.bf16 %v576, %v573
      %v592 = vpack.c.bf16 %v581, %v581
      %595 = vrot.lane.b32.xlu0 %v591, 96
      %v596 = vpop.permute.xlu0 %595
      %597 = vrot.lane.b32.xlu0 %v592, 96
      %v598 = vpop.permute.xlu0 %597
      %vm599 = vcmask 130048
      %v601 = vsel %vm599, %v589, 0
      %v604 = vsel %vm599, %v590, 0
      %v607 = vsel %vm599, %v596, 0
      %v610 = vsel %vm599, %v598, 0
      %612 = vmatprep.subr.bf16.mxu0 0
      %613 = vmatpush1.bf16.xpose.msra.mxu0 %v607
      %614 = vmatprep.subr.bf16.mxu0 0
      %615 = vmatpush1.bf16.xpose.msra.mxu0 %v610
      %616 = vmatprep.subr.bf16.mxu0 0
      %617 = vmatpush1.bf16.xpose.msra.mxu0 0
      %618 = vmatprep.subr.bf16.mxu0 0
      %619 = vmatpush1.bf16.xpose.msra.mxu0 0
      %620 = vmatprep.subr.bf16.mxu0 0
      %621 = vmatpush1.bf16.xpose.msra.mxu0 0
      %622 = vmatprep.subr.bf16.mxu0 0
      %623 = vmatpush1.bf16.xpose.msra.mxu0 0
      %624 = vmatprep.subr.bf16.mxu0 0
      %625 = vmatpush1.bf16.xpose.msra.mxu0 0
      %626 = vmatprep.subr.bf16.mxu0 0
      %627 = vmatpush1.bf16.xpose.msra.mxu0 0
      %628 = vmatprep.subr.bf16.mxu0 0
      %629 = vmatpush1.bf16.xpose.msra.mxu0 0
      %630 = vmatprep.subr.bf16.mxu0 0
      %631 = vmatpush1.bf16.xpose.msra.mxu0 0
      %632 = vmatprep.subr.bf16.mxu0 0
      %633 = vmatpush1.bf16.xpose.msra.mxu0 0
      %634 = vmatprep.subr.bf16.mxu0 0
      %635 = vmatpush1.bf16.xpose.msra.mxu0 0
      %636 = vmatprep.subr.bf16.mxu0 0
      %637 = vmatpush1.bf16.xpose.msra.mxu0 0
      %638 = vmatprep.subr.bf16.mxu0 0
      %639 = vmatpush1.bf16.xpose.msra.mxu0 0
      %640 = vmatprep.subr.bf16.mxu0 0
      %641 = vmatpush1.bf16.xpose.msra.mxu0 0
      %642 = vmatprep.subr.bf16.mxu0 0
      %643 = vmatpush1.bf16.xpose.msra.mxu0 0
      %644 = vmatprep.mubr.bf16.mxu0 0
      %645 = vmatmul.mubr.bf16.gmra.mrb[0].mxu0 %v601
      %v646 = vpop.f32.mrb[0].mxu0
      %v647 = vadd.f32 0.0, %v646
      %v648 = vpop.f32.mrb[0].mxu0
      %v649 = vpop.f32.mrb[0].mxu0
      %v650 = vadd.f32 0.0, %v649
      %v651 = vpop.f32.mrb[0].mxu0
      %652 = vmatprep.mubr.bf16.mxu0 0
      %653 = vmatmul.mubr.bf16.gmra.mrb[0].mxu0 %v604
      %v654 = vpop.f32.mrb[0].mxu0
      %v655 = vadd.f32 0.0, %v654
      %v656 = vpop.f32.mrb[0].mxu0
      %v657 = vpop.f32.mrb[0].mxu0
      %v658 = vpop.f32.mrb[0].mxu0
      %659 = vdwg.mxu0
      %vm660 = vcmask 138240
      %v661 = vsel %vm660, %v647, -inf
      %662 = vmax.xlane.f32.xlu0 %v661
      %v663 = vpop.xlane.xlu0 %662
      %v664 = vsel %vm660, %v650, -inf
      %665 = vmax.xlane.f32.xlu0 %v664
      %v666 = vpop.xlane.xlu0 %665
      %vm667 = vcmask 131072
      %v668 = vsel %vm667, %v655, -inf
      %669 = vmax.xlane.f32.xlu0 %v668
      %v670 = vpop.xlane.xlu0 %669
      %v671 = vsub.f32 %v647, %v663
      %v672 = vsub.f32 %v650, %v666
      %v673 = vsub.f32 %v655, %v670
      %v674 = vmul.f32 %v671, 1.442695
      %v675 = vpow.pop %v674
      %v676 = vmul.f32 %v672, 1.442695
      %v677 = vpow.pop %v676
      %v678 = vmul.f32 %v673, 1.442695
      %v679 = vpow.pop %v678
      %v680 = vsel %vm660, %v675, 0.0
      %681 = vadd.xlane.f32.xlu0 %v680
      %v682 = vpop.xlane.xlu0 %681
      %v683 = vsel %vm660, %v677, 0.0
      %684 = vadd.xlane.f32.xlu0 %v683
      %v685 = vpop.xlane.xlu0 %684
      %v686 = vsel %vm667, %v679, 0.0
      %687 = vadd.xlane.f32.xlu0 %v686
      %v688 = vpop.xlane.xlu0 %687
      %v689 = vrcp.pop %v682
      %v690 = vrcp.pop %v685
      %v691 = vrcp.pop %v688
      %v692 = vmul.f32 %v675, %v689
      %v693 = vmul.f32 %v677, %v690
      %v694 = vmul.f32 %v679, %v691
      %v695 = vpack.c.bf16 %v693, %v692
      %v696 = vpack.c.bf16 %v694, %v694
      %697 = vrot.lane.b32.xlu0 %v591, 64
      %v698 = vpop.permute.xlu0 %697
      %699 = vrot.lane.b32.xlu0 %v592, 64
      %v700 = vpop.permute.xlu0 %699
      %v703 = vsel %vm660, %v695, 0
      %v706 = vsel %vm660, %v696, 0
      %vm708 = vcmask 1040384
      %v709 = vsel 0, 4294967295, 65535
      %v710 = vsel %vm708, %v709, 0
      %v712 = vand.u32 %v700, %v710
      %714 = vmatprep.subr.bf16.mxu0 0
      %715 = vmatpush1.bf16.msra.mxu0 %v698
      %716 = vmatprep.subr.bf16.mxu0 0
      %717 = vmatpush1.bf16.msra.mxu0 %v712
      %718 = vmatprep.subr.bf16.mxu0 0
      %719 = vmatpush1.bf16.msra.mxu0 0
      %720 = vmatprep.subr.bf16.mxu0 0
      %721 = vmatpush1.bf16.msra.mxu0 0
      %722 = vmatprep.subr.bf16.mxu0 0
      %723 = vmatpush1.bf16.msra.mxu0 0
      %724 = vmatprep.subr.bf16.mxu0 0
      %725 = vmatpush1.bf16.msra.mxu0 0
      %726 = vmatprep.subr.bf16.mxu0 0
      %727 = vmatpush1.bf16.msra.mxu0 0
      %728 = vmatprep.subr.bf16.mxu0 0
      %729 = vmatpush1.bf16.msra.mxu0 0
      %730 = vmatprep.subr.bf16.mxu0 0
      %731 = vmatpush1.bf16.msra.mxu0 0
      %732 = vmatprep.subr.bf16.mxu0 0
      %733 = vmatpush1.bf16.msra.mxu0 0
      %734 = vmatprep.subr.bf16.mxu0 0
      %735 = vmatpush1.bf16.msra.mxu0 0
      %736 = vmatprep.subr.bf16.mxu0 0
      %737 = vmatpush1.bf16.msra.mxu0 0
      %738 = vmatprep.subr.bf16.mxu0 0
      %739 = vmatpush1.bf16.msra.mxu0 0
      %740 = vmatprep.subr.bf16.mxu0 0
      %741 = vmatpush1.bf16.msra.mxu0 0
      %742 = vmatprep.subr.bf16.mxu0 0
      %743 = vmatpush1.bf16.msra.mxu0 0
      %744 = vmatprep.subr.bf16.mxu0 0
      %745 = vmatpush1.bf16.msra.mxu0 0
      %746 = vmatprep.mubr.bf16.mxu0 0
      %747 = vmatmul.mubr.bf16.gmra.mrb[0].mxu0 %v703
      %v748 = vpop.f32.mrb[0].mxu0
      %v749 = vadd.f32 0.0, %v748
      %v750 = vpop.f32.mrb[0].mxu0
      %v751 = vpop.f32.mrb[0].mxu0
      %v752 = vadd.f32 0.0, %v751
      %v753 = vpop.f32.mrb[0].mxu0
      %754 = vmatprep.mubr.bf16.mxu0 0
      %755 = vmatmul.mubr.bf16.gmra.mrb[0].mxu0 %v706
      %v756 = vpop.f32.mrb[0].mxu0
      %v757 = vadd.f32 0.0, %v756
      %v758 = vpop.f32.mrb[0].mxu0
      %v759 = vpop.f32.mrb[0].mxu0
      %v760 = vpop.f32.mrb[0].mxu0
      %761 = vdwg.mxu0
      %v762 = vpack.c.bf16 %v752, %v749
      %v763 = vpack.c.bf16 %v757, %v757
      %v766 = vunpack.c.l.b16 %v762
      %v767 = vunpack.c.h.b16 %v762
      %v768 = vunpack.c.l.b16 %v763
      %v769 = vpack.c.b16 %v766, %v766
      %v770 = vpack.c.b16 %v767, %v767
      %v771 = vpack.c.b16 %v768, %v768
      %vm775 = vcmask 125952
      %776 = vst.msk [vmem:[#allocation2] sm:$0xf] %vm775, %v769
      %777 = vst.msk [vmem:[#allocation2 + $0x4] sm:$0xf] %vm775, %v770
      %vm778 = vcmask 122880
      %vm779 = vsmask.f32 256
      %vm780 = vmand %vm778, %vm779
      %v781 = vld [vmem:[#allocation2 + $0x8] sm:$0x1]
      %v782 = vsel %vm780, %v771, %v781
      %783 = vst [vmem:[#allocation2 + $0x8] sm:$0x1] %v782
      %786 = vrot.lane.b32.xlu0 %v589, 112
      %v787 = vpop.permute.xlu0 %786
      %788 = vrot.lane.b32.xlu0 %v590, 112
      %v789 = vpop.permute.xlu0 %788
      %790 = vrot.lane.b32.xlu0 %v591, 80
      %v791 = vpop.permute.xlu0 %790
      %792 = vrot.lane.b32.xlu0 %v592, 80
      %v793 = vpop.permute.xlu0 %792
      %v795 = vsel %vm599, %v787, 0
      %v798 = vsel %vm599, %v789, 0
      %v801 = vsel %vm599, %v791, 0
      %v804 = vsel %vm599, %v793, 0
      %806 = vmatprep.subr.bf16.mxu0 0
      %807 = vmatpush1.bf16.xpose.msra.mxu0 %v801
      %808 = vmatprep.subr.bf16.mxu0 0
      %809 = vmatpush1.bf16.xpose.msra.mxu0 %v804
      %810 = vmatprep.subr.bf16.mxu0 0
      %811 = vmatpush1.bf16.xpose.msra.mxu0 0
      %812 = vmatprep.subr.bf16.mxu0 0
      %813 = vmatpush1.bf16.xpose.msra.mxu0 0
      %814 = vmatprep.subr.bf16.mxu0 0
      %815 = vmatpush1.bf16.xpose.msra.mxu0 0
      %816 = vmatprep.subr.bf16.mxu0 0
      %817 = vmatpush1.bf16.xpose.msra.mxu0 0
      %818 = vmatprep.subr.bf16.mxu0 0
      %819 = vmatpush1.bf16.xpose.msra.mxu0 0
      %820 = vmatprep.subr.bf16.mxu0 0
      %821 = vmatpush1.bf16.xpose.msra.mxu0 0
      %822 = vmatprep.subr.bf16.mxu0 0
      %823 = vmatpush1.bf16.xpose.msra.mxu0 0
      %824 = vmatprep.subr.bf16.mxu0 0
      %825 = vmatpush1.bf16.xpose.msra.mxu0 0
      %826 = vmatprep.subr.bf16.mxu0 0
      %827 = vmatpush1.bf16.xpose.msra.mxu0 0
      %828 = vmatprep.subr.bf16.mxu0 0
      %829 = vmatpush1.bf16.xpose.msra.mxu0 0
      %830 = vmatprep.subr.bf16.mxu0 0
      %831 = vmatpush1.bf16.xpose.msra.mxu0 0
      %832 = vmatprep.subr.bf16.mxu0 0
      %833 = vmatpush1.bf16.xpose.msra.mxu0 0
      %834 = vmatprep.subr.bf16.mxu0 0
      %835 = vmatpush1.bf16.xpose.msra.mxu0 0
      %836 = vmatprep.subr.bf16.mxu0 0
      %837 = vmatpush1.bf16.xpose.msra.mxu0 0
      %838 = vmatprep.mubr.bf16.mxu0 0
      %839 = vmatmul.mubr.bf16.gmra.mrb[0].mxu0 %v795
      %v840 = vpop.f32.mrb[0].mxu0
      %v841 = vadd.f32 0.0, %v840
      %v842 = vpop.f32.mrb[0].mxu0
      %v843 = vpop.f32.mrb[0].mxu0
      %v844 = vadd.f32 0.0, %v843
      %v845 = vpop.f32.mrb[0].mxu0
      %846 = vmatprep.mubr.bf16.mxu0 0
      %847 = vmatmul.mubr.bf16.gmra.mrb[0].mxu0 %v798
      %v848 = vpop.f32.mrb[0].mxu0
      %v849 = vadd.f32 0.0, %v848
      %v850 = vpop.f32.mrb[0].mxu0
      %v851 = vpop.f32.mrb[0].mxu0
      %v852 = vpop.f32.mrb[0].mxu0
      %853 = vdwg.mxu0
      %v854 = vsel %vm660, %v841, -inf
      %855 = vmax.xlane.f32.xlu0 %v854
      %v856 = vpop.xlane.xlu0 %855
      %v857 = vsel %vm660, %v844, -inf
      %858 = vmax.xlane.f32.xlu0 %v857
      %v859 = vpop.xlane.xlu0 %858
      %v860 = vsel %vm667, %v849, -inf
      %861 = vmax.xlane.f32.xlu0 %v860
      %v862 = vpop.xlane.xlu0 %861
      %v863 = vsub.f32 %v841, %v856
      %v864 = vsub.f32 %v844, %v859
      %v865 = vsub.f32 %v849, %v862
      %v866 = vmul.f32 %v863, 1.442695
      %v867 = vpow.pop %v866
      %v868 = vmul.f32 %v864, 1.442695
      %v869 = vpow.pop %v868
      %v870 = vmul.f32 %v865, 1.442695
      %v871 = vpow.pop %v870
      %v872 = vsel %vm660, %v867, 0.0
      %873 = vadd.xlane.f32.xlu0 %v872
      %v874 = vpop.xlane.xlu0 %873
      %v875 = vsel %vm660, %v869, 0.0
      %876 = vadd.xlane.f32.xlu0 %v875
      %v877 = vpop.xlane.xlu0 %876
      %v878 = vsel %vm667, %v871, 0.0
      %879 = vadd.xlane.f32.xlu0 %v878
      %v880 = vpop.xlane.xlu0 %879
      %v881 = vrcp.pop %v874
      %v882 = vrcp.pop %v877
      %v883 = vrcp.pop %v880
      %v884 = vmul.f32 %v867, %v881
      %v885 = vmul.f32 %v869, %v882
      %v886 = vmul.f32 %v871, %v883
      %v887 = vpack.c.bf16 %v885, %v884
      %v888 = vpack.c.bf16 %v886, %v886
      %889 = vrot.lane.b32.xlu0 %v591, 48
      %v890 = vpop.permute.xlu0 %889
      %891 = vrot.lane.b32.xlu0 %v592, 48
      %v892 = vpop.permute.xlu0 %891
      %v895 = vsel %vm660, %v887, 0
      %v898 = vsel %vm660, %v888, 0
      %v901 = vand.u32 %v892, %v710
      %903 = vmatprep.subr.bf16.mxu0 0
      %904 = vmatpush1.bf16.msra.mxu0 %v890
      %905 = vmatprep.subr.bf16.mxu0 0
      %906 = vmatpush1.bf16.msra.mxu0 %v901
      %907 = vmatprep.subr.bf16.mxu0 0
      %908 = vmatpush1.bf16.msra.mxu0 0
      %909 = vmatprep.subr.bf16.mxu0 0
      %910 = vmatpush1.bf16.msra.mxu0 0
      %911 = vmatprep.subr.bf16.mxu0 0
      %912 = vmatpush1.bf16.msra.mxu0 0
      %913 = vmatprep.subr.bf16.mxu0 0
      %914 = vmatpush1.bf16.msra.mxu0 0
      %915 = vmatprep.subr.bf16.mxu0 0
      %916 = vmatpush1.bf16.msra.mxu0 0
      %917 = vmatprep.subr.bf16.mxu0 0
      %918 = vmatpush1.bf16.msra.mxu0 0
      %919 = vmatprep.subr.bf16.mxu0 0
      %920 = vmatpush1.bf16.msra.mxu0 0
      %921 = vmatprep.subr.bf16.mxu0 0
      %922 = vmatpush1.bf16.msra.mxu0 0
      %923 = vmatprep.subr.bf16.mxu0 0
      %924 = vmatpush1.bf16.msra.mxu0 0
      %925 = vmatprep.subr.bf16.mxu0 0
      %926 = vmatpush1.bf16.msra.mxu0 0
      %927 = vmatprep.subr.bf16.mxu0 0
      %928 = vmatpush1.bf16.msra.mxu0 0
      %929 = vmatprep.subr.bf16.mxu0 0
      %930 = vmatpush1.bf16.msra.mxu0 0
      %931 = vmatprep.subr.bf16.mxu0 0
      %932 = vmatpush1.bf16.msra.mxu0 0
      %933 = vmatprep.subr.bf16.mxu0 0
      %934 = vmatpush1.bf16.msra.mxu0 0
      %935 = vmatprep.mubr.bf16.mxu0 0
      %936 = vmatmul.mubr.bf16.gmra.mrb[0].mxu0 %v895
      %v937 = vpop.f32.mrb[0].mxu0
      %v938 = vadd.f32 0.0, %v937
      %v939 = vpop.f32.mrb[0].mxu0
      %v940 = vpop.f32.mrb[0].mxu0
      %v941 = vadd.f32 0.0, %v940
      %v942 = vpop.f32.mrb[0].mxu0
      %943 = vmatprep.mubr.bf16.mxu0 0
      %944 = vmatmul.mubr.bf16.gmra.mrb[0].mxu0 %v898
      %v945 = vpop.f32.mrb[0].mxu0
      %v946 = vadd.f32 0.0, %v945
      %v947 = vpop.f32.mrb[0].mxu0
      %v948 = vpop.f32.mrb[0].mxu0
      %v949 = vpop.f32.mrb[0].mxu0
      %950 = vdwg.mxu0
      %v951 = vpack.c.bf16 %v941, %v938
      %v952 = vpack.c.bf16 %v946, %v946
      %v955 = vunpack.c.l.b16 %v951
      %v956 = vunpack.c.h.b16 %v951
      %v957 = vunpack.c.l.b16 %v952
      %v958 = vpack.c.b16 %v955, %v955
      %v959 = vpack.c.b16 %v956, %v956
      %v960 = vpack.c.b16 %v957, %v957
      %961 = vrot.lane.b32.xlu0 %v958, 16
      %v962 = vpop.permute.xlu0 %961
      %963 = vrot.lane.b32.xlu0 %v959, 16
      %v964 = vpop.permute.xlu0 %963
      %965 = vrot.lane.b32.xlu0 %v960, 16
      %v966 = vpop.permute.xlu0 %965
      %vm970 = vcmask 257152
      %971 = vst.msk [vmem:[#allocation2] sm:$0xf] %vm970, %v962
      %972 = vst.msk [vmem:[#allocation2 + $0x4] sm:$0xf] %vm970, %v964
      %vm973 = vcmask 254080
      %vm974 = vmand %vm973, %vm779
      %v975 = vld [vmem:[#allocation2 + $0x8] sm:$0x1]
      %v976 = vsel %vm974, %v966, %v975
      %977 = vst [vmem:[#allocation2 + $0x8] sm:$0x1] %v976
      %v978 = vld [vmem:[#allocation2] sm:$0xf]
      %v979 = vld [vmem:[#allocation2 + $0x4] sm:$0xf]
      %v980 = vld [vmem:[#allocation2 + $0x8] sm:$0x1]
      %v981 = vld [vmem:[%s5] sm:$0xf]
      %v982 = vld [vmem:[%s5 + $0x4] sm:$0xf]
      %v983 = vld [vmem:[%s5 + $0x8] sm:$0xf]
      %v984 = vld [vmem:[%s5 + $0xc] sm:$0xf]
      %v985 = vld [vmem:[%s6] sm:$0x1]
      %v987 = vlaneseq
      %v988 = vshrl.u32 %v987, 7
      %v989 = vsub.s32 0, %v988
      %v990 = vrot.slane %v985, %v989
      %v995 = vunpack.c.l.b16 %v978
      %v996 = vunpack.c.l.b16 %v979
      %v997 = vunpack.c.l.b16 %v980
      %v998 = vpack.c.b16 %v996, %v995
      %v999 = vpack.c.b16 %v997, %v997
      %v1004 = vunpack.c.l.b16 %v981
      %v1005 = vunpack.c.l.b16 %v982
      %v1006 = vunpack.c.l.b16 %v983
      %v1007 = vunpack.c.l.b16 %v984
      %v1008 = vpack.c.b16 %v1005, %v1004
      %v1009 = vpack.c.b16 %v1007, %v1006
      %v1013 = vsel %vm447, %v998, 0
      %v1016 = vsel %vm447, %v999, 0
      %1018 = vmatprep.subr.bf16.mxu0 0
      %1019 = vmatpush1.bf16.msra.mxu0 %v1008
      %1020 = vmatprep.subr.bf16.mxu0 0
      %1021 = vmatpush1.bf16.msra.mxu0 %v1009
      %1022 = vmatprep.subr.bf16.mxu0 0
      %1023 = vmatpush1.bf16.msra.mxu0 0
      %1024 = vmatprep.subr.bf16.mxu0 0
      %1025 = vmatpush1.bf16.msra.mxu0 0
      %1026 = vmatprep.subr.bf16.mxu0 0
      %1027 = vmatpush1.bf16.msra.mxu0 0
      %1028 = vmatprep.subr.bf16.mxu0 0
      %1029 = vmatpush1.bf16.msra.mxu0 0
      %1030 = vmatprep.subr.bf16.mxu0 0
      %1031 = vmatpush1.bf16.msra.mxu0 0
      %1032 = vmatprep.subr.bf16.mxu0 0
      %1033 = vmatpush1.bf16.msra.mxu0 0
      %1034 = vmatprep.subr.bf16.mxu0 0
      %1035 = vmatpush1.bf16.msra.mxu0 0
      %1036 = vmatprep.subr.bf16.mxu0 0
      %1037 = vmatpush1.bf16.msra.mxu0 0
      %1038 = vmatprep.subr.bf16.mxu0 0
      %1039 = vmatpush1.bf16.msra.mxu0 0
      %1040 = vmatprep.subr.bf16.mxu0 0
      %1041 = vmatpush1.bf16.msra.mxu0 0
      %1042 = vmatprep.subr.bf16.mxu0 0
      %1043 = vmatpush1.bf16.msra.mxu0 0
      %1044 = vmatprep.subr.bf16.mxu0 0
      %1045 = vmatpush1.bf16.msra.mxu0 0
      %1046 = vmatprep.subr.bf16.mxu0 0
      %1047 = vmatpush1.bf16.msra.mxu0 0
      %1048 = vmatprep.subr.bf16.mxu0 0
      %1049 = vmatpush1.bf16.msra.mxu0 0
      %1050 = vmatprep.mubr.bf16.mxu0 0
      %1051 = vmatmul.mubr.bf16.gmra.mrb[0].mxu0 %v1013
      %v1052 = vpop.f32.mrb[0].mxu0
      %v1053 = vadd.f32 %v990, %v1052
      %v1054 = vpop.f32.mrb[0].mxu0
      %v1055 = vpop.f32.mrb[0].mxu0
      %v1056 = vadd.f32 %v990, %v1055
      %v1057 = vpop.f32.mrb[0].mxu0
      %1058 = vmatprep.mubr.bf16.mxu0 0
      %1059 = vmatmul.mubr.bf16.gmra.mrb[0].mxu0 %v1016
      %v1060 = vpop.f32.mrb[0].mxu0
      %v1061 = vadd.f32 %v990, %v1060
      %v1062 = vpop.f32.mrb[0].mxu0
      %v1063 = vpop.f32.mrb[0].mxu0
      %v1064 = vpop.f32.mrb[0].mxu0
      %1065 = vdwg.mxu0
      %v1066 = vadd.f32 %v442, %v1053
      %v1067 = vadd.f32 %v443, %v1056
      %v1068 = vadd.f32 %v444, %v1061
      %v1069 = vld [vmem:[%s7] sm:$0x1]
      %v1070 = vld [vmem:[%s8] sm:$0x1]
      %v1071 = vsel %vm447, %v1066, 0.0
      %1072 = vadd.xlane.f32.xlu0 %v1071
      %v1073 = vpop.xlane.xlu0 %1072
      %v1074 = vsel %vm447, %v1067, 0.0
      %1075 = vadd.xlane.f32.xlu0 %v1074
      %v1076 = vpop.xlane.xlu0 %1075
      %v1077 = vsel %vm454, %v1068, 0.0
      %1078 = vadd.xlane.f32.xlu0 %v1077
      %v1079 = vpop.xlane.xlu0 %1078
      %v1080 = vmul.f32 %v1073, %v458
      %v1081 = vmul.f32 %v1076, %v458
      %v1082 = vmul.f32 %v1079, %v458
      %v1083 = vsub.f32 %v1066, %v1080
      %v1084 = vsub.f32 %v1067, %v1081
      %v1085 = vsub.f32 %v1068, %v1082
      %v1086 = vmul.f32 %v1083, %v1083
      %v1087 = vmul.f32 %v1084, %v1084
      %v1088 = vmul.f32 %v1085, %v1085
      %v1089 = vsel %vm447, %v1086, 0.0
      %1090 = vadd.xlane.f32.xlu0 %v1089
      %v1091 = vpop.xlane.xlu0 %1090
      %v1092 = vsel %vm447, %v1087, 0.0
      %1093 = vadd.xlane.f32.xlu0 %v1092
      %v1094 = vpop.xlane.xlu0 %1093
      %v1095 = vsel %vm454, %v1088, 0.0
      %1096 = vadd.xlane.f32.xlu0 %v1095
      %v1097 = vpop.xlane.xlu0 %1096
      %v1098 = vmul.f32 %v1091, %v458
      %v1099 = vmul.f32 %v1094, %v458
      %v1100 = vmul.f32 %v1097, %v458
      %v1101 = vadd.f32 %v1098, 1e-06
      %v1102 = vadd.f32 %v1099, 1e-06
      %v1103 = vadd.f32 %v1100, 1e-06
      %v1104 = vrsqrt.pop %v1101
      %v1105 = vrsqrt.pop %v1102
      %v1106 = vrsqrt.pop %v1103
      %v1107 = vmul.f32 %v1083, %v1104
      %v1108 = vmul.f32 %v1084, %v1105
      %v1109 = vmul.f32 %v1085, %v1106
      %v1111 = vlaneseq
      %v1112 = vshrl.u32 %v1111, 7
      %v1113 = vsub.s32 0, %v1112
      %v1114 = vrot.slane %v1069, %v1113
      %v1116 = vmul.f32 %v1107, %v1114
      %v1117 = vmul.f32 %v1108, %v1114
      %v1118 = vmul.f32 %v1109, %v1114
      %v1120 = vlaneseq
      %v1121 = vshrl.u32 %v1120, 7
      %v1122 = vsub.s32 0, %v1121
      %v1123 = vrot.slane %v1070, %v1122
      %v1125 = vadd.f32 %v1116, %v1123
      %v1126 = vadd.f32 %v1117, %v1123
      %v1127 = vadd.f32 %v1118, %v1123
      %v1128 = vpack.c.bf16 %v1126, %v1125
      %v1129 = vpack.c.bf16 %v1127, %v1127
      %v1130 = vld [vmem:[%s9] sm:$0xf]
      %v1131 = vld [vmem:[%s9 + $0x4] sm:$0xf]
      %v1132 = vld [vmem:[%s9 + $0x8] sm:$0xf]
      %v1133 = vld [vmem:[%s9 + $0xc] sm:$0xf]
      %v1134 = vld [vmem:[%s10] sm:$0x1]
      %v1136 = vlaneseq
      %v1137 = vshrl.u32 %v1136, 7
      %v1138 = vsub.s32 0, %v1137
      %v1139 = vrot.slane %v1134, %v1138
      %v1145 = vunpack.c.l.b16 %v1130
      %v1146 = vunpack.c.l.b16 %v1131
      %v1147 = vunpack.c.l.b16 %v1132
      %v1148 = vunpack.c.l.b16 %v1133
      %v1149 = vpack.c.b16 %v1146, %v1145
      %v1150 = vpack.c.b16 %v1148, %v1147
      %v1154 = vsel %vm447, %v1128, 0
      %v1157 = vsel %vm447, %v1129, 0
      %1159 = vmatprep.subr.bf16.mxu0 0
      %1160 = vmatpush1.bf16.msra.mxu0 %v1149
      %1161 = vmatprep.subr.bf16.mxu0 0
      %1162 = vmatpush1.bf16.msra.mxu0 %v1150
      %1163 = vmatprep.subr.bf16.mxu0 0
      %1164 = vmatpush1.bf16.msra.mxu0 0
      %1165 = vmatprep.subr.bf16.mxu0 0
      %1166 = vmatpush1.bf16.msra.mxu0 0
      %1167 = vmatprep.subr.bf16.mxu0 0
      %1168 = vmatpush1.bf16.msra.mxu0 0
      %1169 = vmatprep.subr.bf16.mxu0 0
      %1170 = vmatpush1.bf16.msra.mxu0 0
      %1171 = vmatprep.subr.bf16.mxu0 0
      %1172 = vmatpush1.bf16.msra.mxu0 0
      %1173 = vmatprep.subr.bf16.mxu0 0
      %1174 = vmatpush1.bf16.msra.mxu0 0
      %1175 = vmatprep.subr.bf16.mxu0 0
      %1176 = vmatpush1.bf16.msra.mxu0 0
      %1177 = vmatprep.subr.bf16.mxu0 0
      %1178 = vmatpush1.bf16.msra.mxu0 0
      %1179 = vmatprep.subr.bf16.mxu0 0
      %1180 = vmatpush1.bf16.msra.mxu0 0
      %1181 = vmatprep.subr.bf16.mxu0 0
      %1182 = vmatpush1.bf16.msra.mxu0 0
      %1183 = vmatprep.subr.bf16.mxu0 0
      %1184 = vmatpush1.bf16.msra.mxu0 0
      %1185 = vmatprep.subr.bf16.mxu0 0
      %1186 = vmatpush1.bf16.msra.mxu0 0
      %1187 = vmatprep.subr.bf16.mxu0 0
      %1188 = vmatpush1.bf16.msra.mxu0 0
      %1189 = vmatprep.subr.bf16.mxu0 0
      %1190 = vmatpush1.bf16.msra.mxu0 0
      %1191 = vmatprep.mubr.bf16.mxu0 0
      %1192 = vmatmul.mubr.bf16.gmra.mrb[0].mxu0 %v1154
      %v1193 = vpop.f32.mrb[0].mxu0
      %v1194 = vadd.f32 %v1139, %v1193
      %v1195 = vpop.f32.mrb[0].mxu0
      %v1196 = vpop.f32.mrb[0].mxu0
      %v1197 = vadd.f32 %v1139, %v1196
      %v1198 = vpop.f32.mrb[0].mxu0
      %1199 = vmatprep.mubr.bf16.mxu0 0
      %1200 = vmatmul.mubr.bf16.gmra.mrb[0].mxu0 %v1157
      %v1201 = vpop.f32.mrb[0].mxu0
      %v1202 = vadd.f32 %v1139, %v1201
      %v1203 = vpop.f32.mrb[0].mxu0
      %v1204 = vpop.f32.mrb[0].mxu0
      %v1205 = vpop.f32.mrb[0].mxu0
      %1206 = vdwg.mxu0
      %v1207 = vmul.f32 %v1194, 0.5
      %v1208 = vmul.f32 %v1197, 0.5
      %v1209 = vmul.f32 %v1202, 0.5
      %v1210 = vmul.f32 %v1194, 0.044715
      %v1211 = vmul.f32 %v1197, 0.044715
      %v1212 = vmul.f32 %v1202, 0.044715
      %v1213 = vmul.f32 %v1210, %v1194
      %v1214 = vmul.f32 %v1211, %v1197
      %v1215 = vmul.f32 %v1212, %v1202
      %v1216 = vmul.f32 %v1213, %v1194
      %v1217 = vmul.f32 %v1214, %v1197
      %v1218 = vmul.f32 %v1215, %v1202
      %v1219 = vadd.f32 %v1194, %v1216
      %v1220 = vadd.f32 %v1197, %v1217
      %v1221 = vadd.f32 %v1202, %v1218
      %v1222 = vmul.f32 %v1219, 0.7978846
      %v1223 = vmul.f32 %v1220, 0.7978846
      %v1224 = vmul.f32 %v1221, 0.7978846
      %v1225 = vtanh.pop %v1222
      %v1226 = vtanh.pop %v1223
      %v1227 = vtanh.pop %v1224
      %v1228 = vadd.f32 %v1225, 1.0
      %v1229 = vadd.f32 %v1226, 1.0
      %v1230 = vadd.f32 %v1227, 1.0
      %v1231 = vmul.f32 %v1207, %v1228
      %v1232 = vmul.f32 %v1208, %v1229
      %v1233 = vmul.f32 %v1209, %v1230
      %v1234 = vpack.c.bf16 %v1232, %v1231
      %v1235 = vpack.c.bf16 %v1233, %v1233
      %v1236 = vld [vmem:[%s11] sm:$0xf]
      %v1237 = vld [vmem:[%s11 + $0x4] sm:$0xf]
      %v1238 = vld [vmem:[%s11 + $0x8] sm:$0xf]
      %v1239 = vld [vmem:[%s11 + $0xc] sm:$0xf]
      %v1240 = vld [vmem:[%s11 + $0x10] sm:$0xf]
      %v1241 = vld [vmem:[%s11 + $0x14] sm:$0xf]
      %v1242 = vld [vmem:[%s11 + $0x18] sm:$0xf]
      %v1243 = vld [vmem:[%s11 + $0x1c] sm:$0xf]
      %v1244 = vld [vmem:[%s11 + $0x20] sm:$0xf]
      %v1245 = vld [vmem:[%s11 + $0x24] sm:$0xf]
      %v1246 = vld [vmem:[%s11 + $0x28] sm:$0xf]
      %v1247 = vld [vmem:[%s11 + $0x2c] sm:$0xf]
      %v1248 = vld [vmem:[%s11 + $0x30] sm:$0xf]
      %v1249 = vld [vmem:[%s11 + $0x34] sm:$0xf]
      %v1250 = vld [vmem:[%s11 + $0x38] sm:$0xf]
      %v1251 = vld [vmem:[%s11 + $0x3c] sm:$0xf]
      %v1252 = vld [vmem:[%s12] sm:$0x1]
      %v1254 = vlaneseq
      %v1255 = vshrl.u32 %v1254, 7
      %v1256 = vsub.s32 0, %v1255
      %v1257 = vrot.slane %v1252, %v1256
      %v1275 = vunpack.c.l.b16 %v1236
      %v1276 = vunpack.c.l.b16 %v1237
      %v1277 = vunpack.c.l.b16 %v1238
      %v1278 = vunpack.c.l.b16 %v1239
      %v1279 = vunpack.c.l.b16 %v1240
      %v1280 = vunpack.c.l.b16 %v1241
      %v1281 = vunpack.c.l.b16 %v1242
      %v1282 = vunpack.c.l.b16 %v1243
      %v1283 = vunpack.c.l.b16 %v1244
      %v1284 = vunpack.c.l.b16 %v1245
      %v1285 = vunpack.c.l.b16 %v1246
      %v1286 = vunpack.c.l.b16 %v1247
      %v1287 = vunpack.c.l.b16 %v1248
      %v1288 = vunpack.c.l.b16 %v1249
      %v1289 = vunpack.c.l.b16 %v1250
      %v1290 = vunpack.c.l.b16 %v1251
      %v1291 = vpack.c.b16 %v1276, %v1275
      %v1292 = vpack.c.b16 %v1278, %v1277
      %v1293 = vpack.c.b16 %v1280, %v1279
      %v1294 = vpack.c.b16 %v1282, %v1281
      %v1295 = vpack.c.b16 %v1284, %v1283
      %v1296 = vpack.c.b16 %v1286, %v1285
      %v1297 = vpack.c.b16 %v1288, %v1287
      %v1298 = vpack.c.b16 %v1290, %v1289
      %1307 = vmatprep.subr.bf16.mxu0 0
      %1308 = vmatpush1.bf16.msra.mxu0 %v1291
      %1309 = vmatprep.subr.bf16.mxu0 0
      %1310 = vmatpush1.bf16.msra.mxu0 %v1292
      %1311 = vmatprep.subr.bf16.mxu0 0
      %1312 = vmatpush1.bf16.msra.mxu0 %v1293
      %1313 = vmatprep.subr.bf16.mxu0 0
      %1314 = vmatpush1.bf16.msra.mxu0 %v1294
      %1315 = vmatprep.subr.bf16.mxu0 0
      %1316 = vmatpush1.bf16.msra.mxu0 %v1295
      %1317 = vmatprep.subr.bf16.mxu0 0
      %1318 = vmatpush1.bf16.msra.mxu0 %v1296
      %1319 = vmatprep.subr.bf16.mxu0 0
      %1320 = vmatpush1.bf16.msra.mxu0 %v1297
      %1321 = vmatprep.subr.bf16.mxu0 0
      %1322 = vmatpush1.bf16.msra.mxu0 %v1298
      %1323 = vmatprep.subr.bf16.mxu0 0
      %1324 = vmatpush1.bf16.msra.mxu0 0
      %1325 = vmatprep.subr.bf16.mxu0 0
      %1326 = vmatpush1.bf16.msra.mxu0 0
      %1327 = vmatprep.subr.bf16.mxu0 0
      %1328 = vmatpush1.bf16.msra.mxu0 0
      %1329 = vmatprep.subr.bf16.mxu0 0
      %1330 = vmatpush1.bf16.msra.mxu0 0
      %1331 = vmatprep.subr.bf16.mxu0 0
      %1332 = vmatpush1.bf16.msra.mxu0 0
      %1333 = vmatprep.subr.bf16.mxu0 0
      %1334 = vmatpush1.bf16.msra.mxu0 0
      %1335 = vmatprep.subr.bf16.mxu0 0
      %1336 = vmatpush1.bf16.msra.mxu0 0
      %1337 = vmatprep.subr.bf16.mxu0 0
      %1338 = vmatpush1.bf16.msra.mxu0 0
      %1339 = vmatprep.mubr.bf16.mxu0 0
      %1340 = vmatmul.mubr.bf16.gmra.mrb[0].mxu0 %v1234
      %v1341 = vpop.f32.mrb[0].mxu0
      %v1342 = vadd.f32 %v1257, %v1341
      %v1343 = vpop.f32.mrb[0].mxu0
      %v1344 = vpop.f32.mrb[0].mxu0
      %v1345 = vadd.f32 %v1257, %v1344
      %v1346 = vpop.f32.mrb[0].mxu0
      %1347 = vmatprep.mubr.bf16.mxu0 0
      %1348 = vmatmul.mubr.bf16.gmra.mrb[0].mxu0 %v1235
      %v1349 = vpop.f32.mrb[0].mxu0
      %v1350 = vadd.f32 %v1257, %v1349
      %v1351 = vpop.f32.mrb[0].mxu0
      %v1352 = vpop.f32.mrb[0].mxu0
      %v1353 = vpop.f32.mrb[0].mxu0
      %1354 = vdwg.mxu0
      %v1355 = vadd.f32 %v1066, %v1342
      %v1356 = vadd.f32 %v1067, %v1345
      %v1357 = vadd.f32 %v1068, %v1350
      %1358 = vst.msk [vmem:[%s440] sm:$0xff] %vm447, %v1355
      %1359 = vst.msk [vmem:[%s440 + $0x8] sm:$0xff] %vm447, %v1356
      %1360 = vst.msk [vmem:[%s440 + $0x10] sm:$0x1] %vm454, %v1357
      %p1361 = scmp.lt.s32.totalorder %s24, 1
      %s1362 = scalar_select %p1361, %s24, 1
      %s1363 = smul.addr %s1362, 3
      %s1364 = smul.addr %s1363, 8
      %s1365 = scalar_lea.vmem %s13, %s1364
      // Predicated region
      $region73: #{vit_warp_forward.5} parent=71 // pred_check
        %p1366 = pneg %p320
      $region74: #{vit_warp_forward.5} parent=71 // pred_check_branch
        %1368 = sbr.rel (%p1366) target = $region76
      $region75: #{vit_warp_forward.5} parent=71 // pred_region
        _
      $region76: #{vit_warp_forward.5} parent=71 // pred_fallthru
        _
    $region72: #{vit_warp_forward.5} parent=5 // pred_fallthru
      _
    %p1369 = scmp.le.s32.totalorder 2, %s19
    // Predicated region
    $region77: #{vit_warp_forward.5} parent=5 // pred_check
      %p1370 = pneg %p1369
    $region78: #{vit_warp_forward.5} parent=5 // pred_check_branch
      %1372 = sbr.rel (%p1370) target = $region80
    $region79: #{vit_warp_forward.5} parent=5 // pred_region
      %s1373 = ssub.s32 %s19, 2
      // Predicated region
      $region81: #{vit_warp_forward.5} parent=79 // pred_check
        %p1374 = pneg %p326
      $region82: #{vit_warp_forward.5} parent=79 // pred_check_branch
        %1376 = sbr.rel (%p1374) target = $region84
      $region83: #{vit_warp_forward.5} parent=79 // pred_region
        %p1377 = scmp.lt.s32.totalorder %s25, 1
        %s1378 = scalar_select %p1377, %s25, 1
        %s1379 = smul.addr %s1378, 3
        %s1380 = smul.addr %s1379, 8
        %s1381 = scalar_lea.vmem %s13, %s1380
      $region84: #{vit_warp_forward.5} parent=79 // pred_fallthru
        _
    $region80: #{vit_warp_forward.5} parent=5 // pred_fallthru
      _
  $region6: #{vit_warp_forward.5} parent=0 // loop_footer
    %s23 = sadd.s32 1, %s19
  $region7: #{vit_warp_forward.5} parent=0 // loop_footer_branch
    %18 = sbr.rel target = $region3
  $region8: #{vit_warp_forward.5} parent=0 // loop_exit
    _

</llo_original>
